<compile_context>
chip_gen: v5e
topology: v5e:2x2
jax: 0.10.0
libtpu: 0.0.40
codegen_flags: <defaults>
</compile_context>

<pallas_src>
import math

import jax
import jax.numpy as jnp
from jax import lax
from jax.experimental import pallas as pl
from jax.experimental.pallas import tpu as pltpu

_INV_SQRT2 = 1.0 / math.sqrt(2.0)
_LANE = 128


def _round_up(n, m):
    return ((n + m - 1) // m) * m


def _time_mlp_kernel(x_ref, vec_ref, w1st_ref, w1ct_ref, w2t_ref, o_ref):
    # Transposed ("batch on lanes") layout:
    #   x_ref:    (1, TB)                    timesteps for this batch tile
    #   vec_ref:  (half_dim+hidden+dim, 1)   [freqs ; b1 ; b2] column vector
    #   w1st_ref: (hidden, half_dim)         linear1 weights hit by the sin half (transposed)
    #   w1ct_ref: (hidden, half_dim)         linear1 weights hit by the cos half (transposed)
    #   w2t_ref:  (dim, hidden)              linear2 weights (transposed)
    #   o_ref:    (dim, TB)                  out^T ; TB multiple of 128 => unmasked stores
    hidden, half_dim = w1st_ref.shape
    dim = w2t_ref.shape[0]

    freqs = vec_ref[0:half_dim, :]                               # (half_dim, 1)
    b1 = vec_ref[half_dim:half_dim + hidden, :]                  # (hidden, 1)
    b2 = vec_ref[half_dim + hidden:half_dim + hidden + dim, :]   # (dim, 1)

    arg = freqs * x_ref[...]                                     # (half_dim, TB)
    s = jnp.sin(arg)
    c = jnp.cos(arg)

    # linear1 without the concat:
    # ([sin, cos] @ w1)^T == w1[:half].T @ sin^T + w1[half:].T @ cos^T
    h = (jnp.dot(w1st_ref[...], s, preferred_element_type=jnp.float32)
         + jnp.dot(w1ct_ref[...], c, preferred_element_type=jnp.float32)
         + b1)                                                   # (hidden, TB)

    # exact GELU (erf form, matches PyTorch nn.GELU default)
    h = 0.5 * h * (1.0 + lax.erf(h * jnp.float32(_INV_SQRT2)))

    out = jnp.dot(w2t_ref[...], h, preferred_element_type=jnp.float32) + b2
    o_ref[...] = out.astype(o_ref.dtype)                         # (dim, TB)


def time_mlp(x, params, *, block_b=1024):
    """x: (B,) float32 timesteps.  Returns (B, dim) float32."""
    w1, b1, w2, b2, freqs = (params["w1"], params["b1"], params["w2"],
                             params["b2"], params["freqs"])
    B = x.shape[0]
    dim = w2.shape[1]
    hidden = w2.shape[0]
    half_dim = freqs.shape[0]

    # Batch tile: batch lives on the lane axis, so TB must be a multiple of 128.
    # Aim for >= 2 grid tiles whenever the batch allows it so the "parallel"
    # grid axis can shard across v7x's two TensorCores.
    block_b = _round_up(max(block_b, _LANE), _LANE)
    b_lanes = _round_up(B, _LANE)
    if b_lanes <= _LANE:
        TB = _LANE
    else:
        TB = min(block_b, _round_up(-(-b_lanes // 2), _LANE))
    Bp = _round_up(B, TB)
    grid = (Bp // TB,)

    # batch-on-lanes input; padded entries are zeros and sliced off below
    x_row = jnp.zeros((1, Bp), jnp.float32).at[0, :B].set(x.astype(jnp.float32))

    # weights pre-transposed so the kernel computes out^T = w2^T @ gelu(w1^T @ emb^T)
    w1st = w1[:half_dim].T.astype(jnp.float32)       # (hidden, half_dim)  sin half
    w1ct = w1[half_dim:].T.astype(jnp.float32)       # (hidden, half_dim)  cos half
    w2t = w2.T.astype(jnp.float32)                   # (dim, hidden)
    # fold the three tiny resident vectors into one column vector (one DMA)
    vec = jnp.concatenate([freqs.astype(jnp.float32),
                           b1.astype(jnp.float32),
                           b2.astype(jnp.float32)]).reshape(-1, 1)

    resident = lambda shape: pl.BlockSpec(shape, lambda i: (0,) * len(shape))

    out_t = pl.pallas_call(
        _time_mlp_kernel,
        out_shape=jax.ShapeDtypeStruct((dim, Bp), jnp.float32),
        grid=grid,
        in_specs=[
            pl.BlockSpec((1, TB), lambda i: (0, i)),     # x: streamed per batch tile
            resident((half_dim + hidden + dim, 1)),      # [freqs ; b1 ; b2]
            resident((hidden, half_dim)),                # w1^T (sin half)
            resident((hidden, half_dim)),                # w1^T (cos half)
            resident((dim, hidden)),                     # w2^T
        ],
        out_specs=pl.BlockSpec((dim, TB), lambda i: (0, i)),
        compiler_params=pltpu.CompilerParams(
            dimension_semantics=("parallel",)),
    )(x_row, vec, w1st, w1ct, w2t)

    # cheap layout plumbing on a (dim, B) array
    return out_t[:, :B].T


def init_params(key, dim):
    """Deterministic synthetic parameters matching Time_MLP(dim)."""
    half_dim = dim // 2
    k1, k2, k3, k4 = jax.random.split(key, 4)
    hidden = dim * 4
    # PyTorch Linear stores weight as (out, in); we keep the transpose (in, out)
    # so "x @ W + b" matches nn.Linear.
    w1 = jax.random.normal(k1, (dim, hidden), jnp.float32) * (1.0 / math.sqrt(dim))
    b1 = jax.random.normal(k2, (hidden,), jnp.float32) * 0.01
    w2 = jax.random.normal(k3, (hidden, dim), jnp.float32) * (1.0 / math.sqrt(hidden))
    b2 = jax.random.normal(k4, (dim,), jnp.float32) * 0.01
    # matches SinusoidalPosEmb exactly: exp(arange(half_dim) * -log(1e4)/(half_dim-1))
    freqs = jnp.exp(jnp.arange(half_dim, dtype=jnp.float32)
                    * (-math.log(10000.0) / (half_dim - 1)))
    return {"w1": w1, "b1": b1, "w2": w2, "b2": b2, "freqs": freqs}


if __name__ == "__main__":
    dim = 32          # time-embedding dim
    batch = 8         # number of timesteps

    key = jax.random.PRNGKey(0)
    pkey, xkey = jax.random.split(key)
    params = init_params(pkey, dim)

    # timesteps (e.g. diffusion step indices) as floats
    x = jax.random.randint(xkey, (batch,), 0, 1000).astype(jnp.float32)

    out = time_mlp(x, params)
    out = jax.block_until_ready(out)

    # reference in plain JAX, matching the PyTorch module exactly
    arg = x[:, None] * params["freqs"][None, :]
    emb = jnp.concatenate([jnp.sin(arg), jnp.cos(arg)], axis=-1)
    h = emb @ params["w1"] + params["b1"]
    h = 0.5 * h * (1.0 + lax.erf(h / jnp.sqrt(2.0)))
    ref = h @ params["w2"] + params["b2"]

    assert out.shape == (batch, dim)
    assert jnp.allclose(out, ref, atol=1e-5, rtol=1e-5)

    print("KERNEL_OK")
</pallas_src>

<mosaic_0001>
module attributes {stable_mosaic.version = 11 : i64} {
  func.func @_time_mlp_kernel(%arg0: i32, %arg1: memref<1x128xf32, #tpu.memory_space<vmem>>, %arg2: memref<176x1xf32, #tpu.memory_space<vmem>>, %arg3: memref<128x16xf32, #tpu.memory_space<vmem>>, %arg4: memref<128x16xf32, #tpu.memory_space<vmem>>, %arg5: memref<32x128xf32, #tpu.memory_space<vmem>>, %arg6: memref<32x128xf32, #tpu.memory_space<vmem>>) attributes {dimension_semantics = [#tpu.dimension_semantics<parallel>], iteration_bounds = array<i64: 1>, scalar_prefetch = 0 : i64, scratch_operands = 0 : i64, tpu.core_type = #tpu.core_type<tc>, window_params = [{transform_indices = @transform_0, window_bounds = array<i64: 1, 128>}, {pipeline_mode = #tpu.pipeline_mode<synchronous>, transform_indices = @transform_1, window_bounds = array<i64: 176, 1>}, {pipeline_mode = #tpu.pipeline_mode<synchronous>, transform_indices = @transform_2, window_bounds = array<i64: 128, 16>}, {pipeline_mode = #tpu.pipeline_mode<synchronous>, transform_indices = @transform_3, window_bounds = array<i64: 128, 16>}, {pipeline_mode = #tpu.pipeline_mode<synchronous>, transform_indices = @transform_4, window_bounds = array<i64: 32, 128>}, {transform_indices = @transform_5, window_bounds = array<i64: 32, 128>}]} {
    %c0 = arith.constant 0 : index
    %c0_0 = arith.constant 0 : index
    %0 = vector.load %arg2[%c0, %c0_0] : memref<176x1xf32, #tpu.memory_space<vmem>>, vector<16x1xf32>
    %c16 = arith.constant 16 : index
    %c0_1 = arith.constant 0 : index
    %1 = vector.load %arg2[%c16, %c0_1] : memref<176x1xf32, #tpu.memory_space<vmem>>, vector<128x1xf32>
    %c144 = arith.constant 144 : index
    %c0_2 = arith.constant 0 : index
    %2 = vector.load %arg2[%c144, %c0_2] : memref<176x1xf32, #tpu.memory_space<vmem>>, vector<32x1xf32>
    %c0_3 = arith.constant 0 : index
    %c0_4 = arith.constant 0 : index
    %3 = vector.load %arg1[%c0_3, %c0_4] : memref<1x128xf32, #tpu.memory_space<vmem>>, vector<1x128xf32>
    %4 = vector.broadcast %0 : vector<16x1xf32> to vector<16x128xf32>
    %5 = vector.broadcast %3 : vector<1x128xf32> to vector<16x128xf32>
    %6 = arith.mulf %4, %5 : vector<16x128xf32>
    %7 = math.sin %6 : vector<16x128xf32>
    %8 = math.cos %6 : vector<16x128xf32>
    %c0_5 = arith.constant 0 : index
    %c0_6 = arith.constant 0 : index
    %9 = vector.load %arg3[%c0_5, %c0_6] : memref<128x16xf32, #tpu.memory_space<vmem>>, vector<128x16xf32>
    %cst = arith.constant dense<0.000000e+00> : vector<128x128xf32>
    %10 = tpu.matmul %9, %7, %cst {dimension_numbers = #tpu.dot_dimension_numbers<[1], [0], [0], [1], [0, 0, 1, 1], [], []>} : vector<128x16xf32>, vector<16x128xf32>, vector<128x128xf32> -> vector<128x128xf32>
    %c0_7 = arith.constant 0 : index
    %c0_8 = arith.constant 0 : index
    %11 = vector.load %arg4[%c0_7, %c0_8] : memref<128x16xf32, #tpu.memory_space<vmem>>, vector<128x16xf32>
    %cst_9 = arith.constant dense<0.000000e+00> : vector<128x128xf32>
    %12 = tpu.matmul %11, %8, %cst_9 {dimension_numbers = #tpu.dot_dimension_numbers<[1], [0], [0], [1], [0, 0, 1, 1], [], []>} : vector<128x16xf32>, vector<16x128xf32>, vector<128x128xf32> -> vector<128x128xf32>
    %13 = arith.addf %10, %12 : vector<128x128xf32>
    %14 = vector.broadcast %1 : vector<128x1xf32> to vector<128x128xf32>
    %15 = arith.addf %13, %14 : vector<128x128xf32>
    %cst_10 = arith.constant 5.000000e-01 : f32
    %16 = vector.broadcast %cst_10 : f32 to vector<128x128xf32>
    %17 = arith.mulf %16, %15 : vector<128x128xf32>
    %cst_11 = arith.constant 0.707106769 : f32
    %18 = vector.broadcast %cst_11 : f32 to vector<128x128xf32>
    %19 = arith.mulf %15, %18 : vector<128x128xf32>
    %20 = math.erf %19 : vector<128x128xf32>
    %cst_12 = arith.constant 1.000000e+00 : f32
    %21 = vector.broadcast %cst_12 : f32 to vector<128x128xf32>
    %22 = arith.addf %21, %20 : vector<128x128xf32>
    %23 = arith.mulf %17, %22 : vector<128x128xf32>
    %c0_13 = arith.constant 0 : index
    %c0_14 = arith.constant 0 : index
    %24 = vector.load %arg5[%c0_13, %c0_14] : memref<32x128xf32, #tpu.memory_space<vmem>>, vector<32x128xf32>
    %cst_15 = arith.constant dense<0.000000e+00> : vector<32x128xf32>
    %25 = tpu.matmul %24, %23, %cst_15 {dimension_numbers = #tpu.dot_dimension_numbers<[1], [0], [0], [1], [0, 0, 1, 1], [], []>} : vector<32x128xf32>, vector<128x128xf32>, vector<32x128xf32> -> vector<32x128xf32>
    %26 = vector.broadcast %2 : vector<32x1xf32> to vector<32x128xf32>
    %27 = arith.addf %25, %26 : vector<32x128xf32>
    %c0_16 = arith.constant 0 : index
    %c0_17 = arith.constant 0 : index
    %28 = vector.load %arg6[%c0_16, %c0_17] : memref<32x128xf32, #tpu.memory_space<vmem>>, vector<32x128xf32>
    tpu.vector_store %arg6[%c0_16, %c0_17], %27 {strides = array<i32>} : memref<32x128xf32, #tpu.memory_space<vmem>>, vector<32x128xf32>,
    return
  }
  func.func @transform_0(%arg0: i32) -> (i32, i32) {
    %c0_i32 = arith.constant 0 : i32
    %c0_i32_0 = arith.constant 0 : i32
    return %c0_i32, %arg0 : i32, i32
  }
  func.func @transform_1(%arg0: i32) -> (i32, i32) {
    %c0_i32 = arith.constant 0 : i32
    %c0_i32_0 = arith.constant 0 : i32
    %c0_i32_1 = arith.constant 0 : i32
    return %c0_i32, %c0_i32_0 : i32, i32
  }
  func.func @transform_2(%arg0: i32) -> (i32, i32) {
    %c0_i32 = arith.constant 0 : i32
    %c0_i32_0 = arith.constant 0 : i32
    %c0_i32_1 = arith.constant 0 : i32
    return %c0_i32, %c0_i32_0 : i32, i32
  }
  func.func @transform_3(%arg0: i32) -> (i32, i32) {
    %c0_i32 = arith.constant 0 : i32
    %c0_i32_0 = arith.constant 0 : i32
    %c0_i32_1 = arith.constant 0 : i32
    return %c0_i32, %c0_i32_0 : i32, i32
  }
  func.func @transform_4(%arg0: i32) -> (i32, i32) {
    %c0_i32 = arith.constant 0 : i32
    %c0_i32_0 = arith.constant 0 : i32
    %c0_i32_1 = arith.constant 0 : i32
    return %c0_i32, %c0_i32_0 : i32, i32
  }
  func.func @transform_5(%arg0: i32) -> (i32, i32) {
    %c0_i32 = arith.constant 0 : i32
    %c0_i32_0 = arith.constant 0 : i32
    return %c0_i32, %arg0 : i32, i32
  }
}

</mosaic_0001>

<llo_original>
// kernel: tpu_custom_call.1
$region0: #{tpu_custom_call.1}
  #allocation0 [shape = 'u32[]', space=smem, size = 0x4, offset = 0x4, fixed_abs, tag = 'smem constant byte address 0x4 - core index']
  #allocation1 [shape = 'u32[72,128]{1,0:T(1,128)}', space=vmem, size = 0x9000, scoped, tag = 'internal scratch']
  %s0 = inlined_call_operand.vmem [shape: f32[1,128], index: 0, kind: input, shape index: {}]
  %s1 = inlined_call_operand.vmem [shape: f32[176,1], index: 1, kind: input, shape index: {}]
  %s2 = inlined_call_operand.vmem [shape: f32[128,16], index: 2, kind: input, shape index: {}]
  %s3 = inlined_call_operand.vmem [shape: f32[128,16], index: 3, kind: input, shape index: {}]
  %s4 = inlined_call_operand.vmem [shape: f32[32,128], index: 4, kind: input, shape index: {}]
  %s5 = inlined_call_operand.hbm [shape: f32[32,128], index: 5, kind: output, shape index: {}]
  %s6 = sld [smem:[#allocation0]]
  $region30: #{tpu_custom_call.1} parent=0
    _
  %s8 = ssub.s32 1, %s6
  %s9 = scalar_select 0, %s8, %s6
  $region1: #{tpu_custom_call.1} parent=0
    #allocation2 [shape = 'u8[16384]{0}', space=vmem, size = 0x4000, scoped, tag = 'output window, operand 0, single buffered']
    #allocation3 [shape = 's32[1]{0}', space=sflag, size = 0x4, scoped, tag = 'scoped memory for tpu_custom_call.1']
    %10 = vsyncpa [#allocation3], 0
    // Predicated region
    $region2: #{tpu_custom_call.1} parent=1 // pred_check
      _
    $region3: #{tpu_custom_call.1} parent=1 // pred_check_branch
      %12 = sbr.rel (0) target = $region5
    $region4: #{tpu_custom_call.1} parent=1 // pred_region
      _
    $region5: #{tpu_custom_call.1} parent=1 // pred_fallthru
      _
    // Predicated region
    $region6: #{tpu_custom_call.1} parent=1 // pred_check
      _
    $region7: #{tpu_custom_call.1} parent=1 // pred_check_branch
      %14 = sbr.rel (0) target = $region9
    $region8: #{tpu_custom_call.1} parent=1 // pred_region
      _
    $region9: #{tpu_custom_call.1} parent=1 // pred_fallthru
      _
    // Predicated region
    $region10: #{tpu_custom_call.1} parent=1 // pred_check
      _
    $region11: #{tpu_custom_call.1} parent=1 // pred_check_branch
      %16 = sbr.rel (0) target = $region13
    $region12: #{tpu_custom_call.1} parent=1 // pred_region
      _
    $region13: #{tpu_custom_call.1} parent=1 // pred_fallthru
      _
    // Predicated region
    $region14: #{tpu_custom_call.1} parent=1 // pred_check
      _
    $region15: #{tpu_custom_call.1} parent=1 // pred_check_branch
      %18 = sbr.rel (0) target = $region17
    $region16: #{tpu_custom_call.1} parent=1 // pred_region
      _
    $region17: #{tpu_custom_call.1} parent=1 // pred_fallthru
      _
    // Predicated region
    $region18: #{tpu_custom_call.1} parent=1 // pred_check
      _
    $region19: #{tpu_custom_call.1} parent=1 // pred_check_branch
      %20 = sbr.rel (0) target = $region21
    $region20: #{tpu_custom_call.1} parent=1 // pred_region
      _
    $region21: #{tpu_custom_call.1} parent=1 // pred_fallthru
      _
    %v21 = vld [vmem:[%s1] sm:$0xff]
    %v22 = vld [vmem:[%s1 + $0x8] sm:$0xff]
    %v23 = vld [vmem:[%s1 + $0x10] sm:$0xff]
    %v24 = vld [vmem:[%s1 + $0x18] sm:$0xff]
    %v25 = vld [vmem:[%s1 + $0x20] sm:$0xff]
    %v26 = vld [vmem:[%s1 + $0x28] sm:$0xff]
    %v27 = vld [vmem:[%s1 + $0x30] sm:$0xff]
    %v28 = vld [vmem:[%s1 + $0x38] sm:$0xff]
    %v29 = vld [vmem:[%s1 + $0x40] sm:$0xff]
    %v30 = vld [vmem:[%s1 + $0x48] sm:$0xff]
    %v31 = vld [vmem:[%s1 + $0x50] sm:$0xff]
    %v32 = vld [vmem:[%s1 + $0x58] sm:$0xff]
    %v33 = vld [vmem:[%s1 + $0x60] sm:$0xff]
    %v34 = vld [vmem:[%s1 + $0x68] sm:$0xff]
    %v35 = vld [vmem:[%s1 + $0x70] sm:$0xff]
    %v36 = vld [vmem:[%s1 + $0x78] sm:$0xff]
    %v37 = vld [vmem:[%s1 + $0x80] sm:$0xff]
    %v38 = vld [vmem:[%s1 + $0x88] sm:$0xff]
    %v39 = vld [vmem:[%s1 + $0x90] sm:$0xff]
    %v40 = vld [vmem:[%s1 + $0x98] sm:$0xff]
    %v41 = vld [vmem:[%s1 + $0xa0] sm:$0xff]
    %v42 = vld [vmem:[%s1 + $0xa8] sm:$0xff]
    %v43 = vld [vmem:[%s0] sm:$0x1]
    %45 = vset.pattern.permute.xlu0 0
    %46 = vperm.xlu0 %45, %v21
    %v47 = vpop.permute.xlu0 %46
    %50 = vset.pattern.permute.xlu0 0
    %51 = vperm.xlu0 %50, %v22
    %v52 = vpop.permute.xlu0 %51
    %v55 = vperm.slane %v43, 0
    %v57 = vmul.f32 %v47, %v55
    %v58 = vmul.f32 %v52, %v55
    %v59 = vand.u32 2147483647, %v57
    %vm60 = vcmp.le.f32.partialorder %v59, 0.7853982
    %vm61 = vcmp.lt.s32.totalorder %v57, 0
    %v62 = vand.u32 %v57, 2139095040
    %v63 = vshrl.u32 %v62, 23
    %v64 = vsub.s32 %v63, 127
    %v65 = vand.u32 2147483647, %v57
    %v66 = vand.u32 %v65, 8388607
    %v67 = vor.u32 %v66, 8388608
    %v68 = vsub.s32 0, %v67
    %v69 = vadd.s32 %v64, 1
    %vm70 = vcmp.gt.s32.totalorder %v69, 0
    %v71 = vsel %vm70, %v69, 0
    %v72 = vshrl.u32 %v71, 5
    %v73 = vand.u32 %v71, 31
    %v74 = vsub.s32 32, %v73
    %v75 = vshrl.u32 683565275, %v74
    %v76 = vshll.u32 683565275, %v73
    %v77 = vshrl.u32 2475754826, %v74
    %v78 = vor.u32 %v76, %v77
    %v79 = vshll.u32 2475754826, %v73
    %v80 = vshrl.u32 2131351028, %v74
    %v81 = vor.u32 %v79, %v80
    %v82 = vshll.u32 2131351028, %v73
    %v83 = vshrl.u32 2102212464, %v74
    %v84 = vor.u32 %v82, %v83
    %v85 = vshll.u32 2102212464, %v73
    %v86 = vshrl.u32 920167782, %v74
    %v87 = vor.u32 %v85, %v86
    %v88 = vshll.u32 920167782, %v73
    %v89 = vshrl.u32 1326507024, %v74
    %v90 = vor.u32 %v88, %v89
    %vm91 = vcmp.lt.s32.totalorder %v72, 1
    %vm92 = vcmp.lt.s32.totalorder %v72, 2
    %vm93 = vcmp.lt.s32.totalorder %v72, 3
    %vm94 = vcmp.lt.s32.totalorder %v72, 4
    %v95 = vsel %vm91, %v75, %v78
    %v96 = vsel %vm94, %v84, 2102212464
    %v97 = vsel %vm93, %v81, %v96
    %v98 = vsel %vm92, %v95, %v97
    %v99 = vsel %vm91, %v78, %v81
    %v100 = vsel %vm94, %v87, 920167782
    %v101 = vsel %vm93, %v84, %v100
    %v102 = vsel %vm92, %v99, %v101
    %v103 = vsel %vm91, %v81, %v84
    %v104 = vsel %vm94, %v90, 1326507024
    %v105 = vsel %vm93, %v87, %v104
    %v106 = vsel %vm92, %v103, %v105
    %v107 = vshll.u32 %v67, 8
    %v108 = vand.u32 %v107, 65535
    %v109 = vshrl.u32 %v107, 16
    %v110 = vand.u32 %v106, 65535
    %v111 = vshrl.u32 %v106, 16
    %v112 = vmul.u32 %v108, %v110
    %v113 = vmul.u32 %v108, %v111
    %v114 = vmul.u32 %v109, %v110
    %v115 = vmul.u32 %v109, %v111
    %v116 = vshll.u32 %v113, 16
    %v117 = vshrl.u32 %v113, 16
    %v118 = vshll.u32 %v114, 16
    %v119 = vshrl.u32 %v114, 16
    %vm120 = vc.u32 %v112, %v116
    %v121 = vsel %vm120, 1, 0
    %v122 = vadd.s32 %v112, %v116
    %v123 = vadd.s32 %v115, %v121
    %vm124 = vc.u32 %v122, %v118
    %v125 = vsel %vm124, 1, 0
    %v126 = vadd.s32 %v122, %v118
    %v127 = vadd.s32 %v123, %v125
    %v128 = vadd.s32 %v127, %v117
    %v129 = vadd.s32 %v128, %v119
    %v130 = vand.u32 %v107, 65535
    %v131 = vshrl.u32 %v107, 16
    %v132 = vand.u32 %v102, 65535
    %v133 = vshrl.u32 %v102, 16
    %v134 = vmul.u32 %v130, %v132
    %v135 = vmul.u32 %v130, %v133
    %v136 = vmul.u32 %v131, %v132
    %v137 = vmul.u32 %v131, %v133
    %v138 = vshll.u32 %v135, 16
    %v139 = vshrl.u32 %v135, 16
    %v140 = vshll.u32 %v136, 16
    %v141 = vshrl.u32 %v136, 16
    %vm142 = vc.u32 %v134, %v138
    %v143 = vsel %vm142, 1, 0
    %v144 = vadd.s32 %v134, %v138
    %v145 = vadd.s32 %v137, %v143
    %vm146 = vc.u32 %v144, %v140
    %v147 = vsel %vm146, 1, 0
    %v148 = vadd.s32 %v144, %v140
    %v149 = vadd.s32 %v145, %v147
    %v150 = vadd.s32 %v149, %v139
    %v151 = vadd.s32 %v150, %v141
    %v152 = vmul.u32 %v107, %v98
    %v153 = vadd.s32 %v129, %v148
    %vm154 = vc.u32 %v129, %v148
    %v155 = vadd.s32 %v151, 1
    %v156 = vsel %vm154, %v155, %v151
    %v157 = vadd.s32 %v152, %v156
    %v158 = vadd.s32 %v157, 536870912
    %v159 = vshrl.u32 %v158, 30
    %v160 = vshll.u32 %v159, 30
    %v161 = vsub.s32 %v157, %v160
    %vm162 = vcmp.lt.s32.totalorder %v161, 0
    %v163 = vsub.s32 0, %v161
    %v164 = vsel %vm162, %v163, %v161
    %v165 = vclz %v164
    %v166 = vsub.s32 %v165, 2
    %vm167 = vcmp.gt.s32.totalorder 0, %v166
    %v168 = vsel %vm167, 0, %v166
    %v169 = vsub.s32 32, %v168
    %v170 = vshll.u32 %v161, %v168
    %v171 = vshrl.u32 %v153, %v169
    %v172 = vor.u32 %v170, %v171
    %v173 = vsub.s32 4294967266, %v168
    %v174 = vadd.s32 %v173, 127
    %v175 = vshll.u32 %v174, 23
    %v176 = vor.u32 4788187, %v175
    %v177 = vand.u32 2147483647, %v176
    %v179 = vcvt.s32.f32 %v172
    %v180 = vmul.f32 %v179, %v177
    %v181 = vxor.u32 %v180, 2147483648
    %v182 = vsel %vm61, %v181, %v180
    %v183 = vsub.s32 4, %v159
    %v184 = vsel %vm61, %v183, %v159
    %v185 = vsel %vm60, %v57, %v182
    %v186 = vsel %vm60, 0, %v184
    %v187 = vmul.f32 %v185, %v185
    %v188 = vmul.f32 %v187, -0.001358992
    %v189 = vadd.f32 %v188, 0.041655596
    %v190 = vmul.f32 %v187, %v189
    %v191 = vadd.f32 %v190, -0.4999988
    %v192 = vmul.f32 %v187, %v191
    %v193 = vadd.f32 1.0, %v192
    %v194 = vmul.f32 %v185, %v185
    %v195 = vmul.f32 %v194, -0.00019511016
    %v196 = vadd.f32 %v195, 0.008332121
    %v197 = vmul.f32 %v194, %v196
    %v198 = vadd.f32 %v197, -0.16666654
    %v199 = vmul.f32 %v194, %v198
    %v200 = vadd.f32 %v199, 1.0
    %v201 = vmul.f32 %v200, %v185
    %vm202 = vweird.f32 %v57
    %v203 = vadd.s32 %v186, 3
    %v204 = vand.u32 %v203, 3
    %vm205 = vcmp.lt.s32.totalorder %v204, 2
    %vm206 = vcmp.eq.s32.totalorder %v204, 0
    %v207 = vxor.u32 %v201, 2147483648
    %v208 = vsel %vm206, %v193, %v207
    %vm209 = vcmp.eq.s32.totalorder %v204, 2
    %v210 = vxor.u32 %v193, 2147483648
    %v211 = vsel %vm209, %v210, %v201
    %v212 = vsel %vm205, %v208, %v211
    %v213 = vsel %vm202, nan, %v212
    %v214 = vand.u32 2147483647, %v58
    %vm215 = vcmp.le.f32.partialorder %v214, 0.7853982
    %vm216 = vcmp.lt.s32.totalorder %v58, 0
    %v217 = vand.u32 %v58, 2139095040
    %v218 = vshrl.u32 %v217, 23
    %v219 = vsub.s32 %v218, 127
    %v220 = vand.u32 2147483647, %v58
    %v221 = vand.u32 %v220, 8388607
    %v222 = vor.u32 %v221, 8388608
    %v223 = vsub.s32 0, %v222
    %v224 = vadd.s32 %v219, 1
    %vm225 = vcmp.gt.s32.totalorder %v224, 0
    %v226 = vsel %vm225, %v224, 0
    %v227 = vshrl.u32 %v226, 5
    %v228 = vand.u32 %v226, 31
    %v229 = vsub.s32 32, %v228
    %v230 = vshrl.u32 683565275, %v229
    %v231 = vshll.u32 683565275, %v228
    %v232 = vshrl.u32 2475754826, %v229
    %v233 = vor.u32 %v231, %v232
    %v234 = vshll.u32 2475754826, %v228
    %v235 = vshrl.u32 2131351028, %v229
    %v236 = vor.u32 %v234, %v235
    %v237 = vshll.u32 2131351028, %v228
    %v238 = vshrl.u32 2102212464, %v229
    %v239 = vor.u32 %v237, %v238
    %v240 = vshll.u32 2102212464, %v228
    %v241 = vshrl.u32 920167782, %v229
    %v242 = vor.u32 %v240, %v241
    %v243 = vshll.u32 920167782, %v228
    %v244 = vshrl.u32 1326507024, %v229
    %v245 = vor.u32 %v243, %v244
    %vm246 = vcmp.lt.s32.totalorder %v227, 1
    %vm247 = vcmp.lt.s32.totalorder %v227, 2
    %vm248 = vcmp.lt.s32.totalorder %v227, 3
    %vm249 = vcmp.lt.s32.totalorder %v227, 4
    %v250 = vsel %vm246, %v230, %v233
    %v251 = vsel %vm249, %v239, 2102212464
    %v252 = vsel %vm248, %v236, %v251
    %v253 = vsel %vm247, %v250, %v252
    %v254 = vsel %vm246, %v233, %v236
    %v255 = vsel %vm249, %v242, 920167782
    %v256 = vsel %vm248, %v239, %v255
    %v257 = vsel %vm247, %v254, %v256
    %v258 = vsel %vm246, %v236, %v239
    %v259 = vsel %vm249, %v245, 1326507024
    %v260 = vsel %vm248, %v242, %v259
    %v261 = vsel %vm247, %v258, %v260
    %v262 = vshll.u32 %v222, 8
    %v263 = vand.u32 %v262, 65535
    %v264 = vshrl.u32 %v262, 16
    %v265 = vand.u32 %v261, 65535
    %v266 = vshrl.u32 %v261, 16
    %v267 = vmul.u32 %v263, %v265
    %v268 = vmul.u32 %v263, %v266
    %v269 = vmul.u32 %v264, %v265
    %v270 = vmul.u32 %v264, %v266
    %v271 = vshll.u32 %v268, 16
    %v272 = vshrl.u32 %v268, 16
    %v273 = vshll.u32 %v269, 16
    %v274 = vshrl.u32 %v269, 16
    %vm275 = vc.u32 %v267, %v271
    %v276 = vsel %vm275, 1, 0
    %v277 = vadd.s32 %v267, %v271
    %v278 = vadd.s32 %v270, %v276
    %vm279 = vc.u32 %v277, %v273
    %v280 = vsel %vm279, 1, 0
    %v281 = vadd.s32 %v277, %v273
    %v282 = vadd.s32 %v278, %v280
    %v283 = vadd.s32 %v282, %v272
    %v284 = vadd.s32 %v283, %v274
    %v285 = vand.u32 %v262, 65535
    %v286 = vshrl.u32 %v262, 16
    %v287 = vand.u32 %v257, 65535
    %v288 = vshrl.u32 %v257, 16
    %v289 = vmul.u32 %v285, %v287
    %v290 = vmul.u32 %v285, %v288
    %v291 = vmul.u32 %v286, %v287
    %v292 = vmul.u32 %v286, %v288
    %v293 = vshll.u32 %v290, 16
    %v294 = vshrl.u32 %v290, 16
    %v295 = vshll.u32 %v291, 16
    %v296 = vshrl.u32 %v291, 16
    %vm297 = vc.u32 %v289, %v293
    %v298 = vsel %vm297, 1, 0
    %v299 = vadd.s32 %v289, %v293
    %v300 = vadd.s32 %v292, %v298
    %vm301 = vc.u32 %v299, %v295
    %v302 = vsel %vm301, 1, 0
    %v303 = vadd.s32 %v299, %v295
    %v304 = vadd.s32 %v300, %v302
    %v305 = vadd.s32 %v304, %v294
    %v306 = vadd.s32 %v305, %v296
    %v307 = vmul.u32 %v262, %v253
    %v308 = vadd.s32 %v284, %v303
    %vm309 = vc.u32 %v284, %v303
    %v310 = vadd.s32 %v306, 1
    %v311 = vsel %vm309, %v310, %v306
    %v312 = vadd.s32 %v307, %v311
    %v313 = vadd.s32 %v312, 536870912
    %v314 = vshrl.u32 %v313, 30
    %v315 = vshll.u32 %v314, 30
    %v316 = vsub.s32 %v312, %v315
    %vm317 = vcmp.lt.s32.totalorder %v316, 0
    %v318 = vsub.s32 0, %v316
    %v319 = vsel %vm317, %v318, %v316
    %v320 = vclz %v319
    %v321 = vsub.s32 %v320, 2
    %vm322 = vcmp.gt.s32.totalorder 0, %v321
    %v323 = vsel %vm322, 0, %v321
    %v324 = vsub.s32 32, %v323
    %v325 = vshll.u32 %v316, %v323
    %v326 = vshrl.u32 %v308, %v324
    %v327 = vor.u32 %v325, %v326
    %v328 = vsub.s32 4294967266, %v323
    %v329 = vadd.s32 %v328, 127
    %v330 = vshll.u32 %v329, 23
    %v331 = vor.u32 4788187, %v330
    %v332 = vand.u32 2147483647, %v331
    %v334 = vcvt.s32.f32 %v327
    %v335 = vmul.f32 %v334, %v332
    %v336 = vxor.u32 %v335, 2147483648
    %v337 = vsel %vm216, %v336, %v335
    %v338 = vsub.s32 4, %v314
    %v339 = vsel %vm216, %v338, %v314
    %v340 = vsel %vm215, %v58, %v337
    %v341 = vsel %vm215, 0, %v339
    %v342 = vmul.f32 %v340, %v340
    %v343 = vmul.f32 %v342, -0.001358992
    %v344 = vadd.f32 %v343, 0.041655596
    %v345 = vmul.f32 %v342, %v344
    %v346 = vadd.f32 %v345, -0.4999988
    %v347 = vmul.f32 %v342, %v346
    %v348 = vadd.f32 1.0, %v347
    %v349 = vmul.f32 %v340, %v340
    %v350 = vmul.f32 %v349, -0.00019511016
    %v351 = vadd.f32 %v350, 0.008332121
    %v352 = vmul.f32 %v349, %v351
    %v353 = vadd.f32 %v352, -0.16666654
    %v354 = vmul.f32 %v349, %v353
    %v355 = vadd.f32 %v354, 1.0
    %v356 = vmul.f32 %v355, %v340
    %vm357 = vweird.f32 %v58
    %v358 = vadd.s32 %v341, 3
    %v359 = vand.u32 %v358, 3
    %vm360 = vcmp.lt.s32.totalorder %v359, 2
    %vm361 = vcmp.eq.s32.totalorder %v359, 0
    %v362 = vxor.u32 %v356, 2147483648
    %v363 = vsel %vm361, %v348, %v362
    %vm364 = vcmp.eq.s32.totalorder %v359, 2
    %v365 = vxor.u32 %v348, 2147483648
    %v366 = vsel %vm364, %v365, %v356
    %v367 = vsel %vm360, %v363, %v366
    %v368 = vsel %vm357, nan, %v367
    %v369 = vand.u32 2147483647, %v57
    %vm370 = vcmp.le.f32.partialorder %v369, 0.7853982
    %vm371 = vcmp.lt.s32.totalorder %v57, 0
    %v372 = vand.u32 %v57, 2139095040
    %v373 = vshrl.u32 %v372, 23
    %v374 = vsub.s32 %v373, 127
    %v375 = vand.u32 2147483647, %v57
    %v376 = vand.u32 %v375, 8388607
    %v377 = vor.u32 %v376, 8388608
    %v378 = vsub.s32 0, %v377
    %v379 = vadd.s32 %v374, 1
    %vm380 = vcmp.gt.s32.totalorder %v379, 0
    %v381 = vsel %vm380, %v379, 0
    %v382 = vshrl.u32 %v381, 5
    %v383 = vand.u32 %v381, 31
    %v384 = vsub.s32 32, %v383
    %v385 = vshrl.u32 683565275, %v384
    %v386 = vshll.u32 683565275, %v383
    %v387 = vshrl.u32 2475754826, %v384
    %v388 = vor.u32 %v386, %v387
    %v389 = vshll.u32 2475754826, %v383
    %v390 = vshrl.u32 2131351028, %v384
    %v391 = vor.u32 %v389, %v390
    %v392 = vshll.u32 2131351028, %v383
    %v393 = vshrl.u32 2102212464, %v384
    %v394 = vor.u32 %v392, %v393
    %v395 = vshll.u32 2102212464, %v383
    %v396 = vshrl.u32 920167782, %v384
    %v397 = vor.u32 %v395, %v396
    %v398 = vshll.u32 920167782, %v383
    %v399 = vshrl.u32 1326507024, %v384
    %v400 = vor.u32 %v398, %v399
    %vm401 = vcmp.lt.s32.totalorder %v382, 1
    %vm402 = vcmp.lt.s32.totalorder %v382, 2
    %vm403 = vcmp.lt.s32.totalorder %v382, 3
    %vm404 = vcmp.lt.s32.totalorder %v382, 4
    %v405 = vsel %vm401, %v385, %v388
    %v406 = vsel %vm404, %v394, 2102212464
    %v407 = vsel %vm403, %v391, %v406
    %v408 = vsel %vm402, %v405, %v407
    %v409 = vsel %vm401, %v388, %v391
    %v410 = vsel %vm404, %v397, 920167782
    %v411 = vsel %vm403, %v394, %v410
    %v412 = vsel %vm402, %v409, %v411
    %v413 = vsel %vm401, %v391, %v394
    %v414 = vsel %vm404, %v400, 1326507024
    %v415 = vsel %vm403, %v397, %v414
    %v416 = vsel %vm402, %v413, %v415
    %v417 = vshll.u32 %v377, 8
    %v418 = vand.u32 %v417, 65535
    %v419 = vshrl.u32 %v417, 16
    %v420 = vand.u32 %v416, 65535
    %v421 = vshrl.u32 %v416, 16
    %v422 = vmul.u32 %v418, %v420
    %v423 = vmul.u32 %v418, %v421
    %v424 = vmul.u32 %v419, %v420
    %v425 = vmul.u32 %v419, %v421
    %v426 = vshll.u32 %v423, 16
    %v427 = vshrl.u32 %v423, 16
    %v428 = vshll.u32 %v424, 16
    %v429 = vshrl.u32 %v424, 16
    %vm430 = vc.u32 %v422, %v426
    %v431 = vsel %vm430, 1, 0
    %v432 = vadd.s32 %v422, %v426
    %v433 = vadd.s32 %v425, %v431
    %vm434 = vc.u32 %v432, %v428
    %v435 = vsel %vm434, 1, 0
    %v436 = vadd.s32 %v432, %v428
    %v437 = vadd.s32 %v433, %v435
    %v438 = vadd.s32 %v437, %v427
    %v439 = vadd.s32 %v438, %v429
    %v440 = vand.u32 %v417, 65535
    %v441 = vshrl.u32 %v417, 16
    %v442 = vand.u32 %v412, 65535
    %v443 = vshrl.u32 %v412, 16
    %v444 = vmul.u32 %v440, %v442
    %v445 = vmul.u32 %v440, %v443
    %v446 = vmul.u32 %v441, %v442
    %v447 = vmul.u32 %v441, %v443
    %v448 = vshll.u32 %v445, 16
    %v449 = vshrl.u32 %v445, 16
    %v450 = vshll.u32 %v446, 16
    %v451 = vshrl.u32 %v446, 16
    %vm452 = vc.u32 %v444, %v448
    %v453 = vsel %vm452, 1, 0
    %v454 = vadd.s32 %v444, %v448
    %v455 = vadd.s32 %v447, %v453
    %vm456 = vc.u32 %v454, %v450
    %v457 = vsel %vm456, 1, 0
    %v458 = vadd.s32 %v454, %v450
    %v459 = vadd.s32 %v455, %v457
    %v460 = vadd.s32 %v459, %v449
    %v461 = vadd.s32 %v460, %v451
    %v462 = vmul.u32 %v417, %v408
    %v463 = vadd.s32 %v439, %v458
    %vm464 = vc.u32 %v439, %v458
    %v465 = vadd.s32 %v461, 1
    %v466 = vsel %vm464, %v465, %v461
    %v467 = vadd.s32 %v462, %v466
    %v468 = vadd.s32 %v467, 536870912
    %v469 = vshrl.u32 %v468, 30
    %v470 = vshll.u32 %v469, 30
    %v471 = vsub.s32 %v467, %v470
    %vm472 = vcmp.lt.s32.totalorder %v471, 0
    %v473 = vsub.s32 0, %v471
    %v474 = vsel %vm472, %v473, %v471
    %v475 = vclz %v474
    %v476 = vsub.s32 %v475, 2
    %vm477 = vcmp.gt.s32.totalorder 0, %v476
    %v478 = vsel %vm477, 0, %v476
    %v479 = vsub.s32 32, %v478
    %v480 = vshll.u32 %v471, %v478
    %v481 = vshrl.u32 %v463, %v479
    %v482 = vor.u32 %v480, %v481
    %v483 = vsub.s32 4294967266, %v478
    %v484 = vadd.s32 %v483, 127
    %v485 = vshll.u32 %v484, 23
    %v486 = vor.u32 4788187, %v485
    %v487 = vand.u32 2147483647, %v486
    %v489 = vcvt.s32.f32 %v482
    %v490 = vmul.f32 %v489, %v487
    %v491 = vxor.u32 %v490, 2147483648
    %v492 = vsel %vm371, %v491, %v490
    %v493 = vsub.s32 4, %v469
    %v494 = vsel %vm371, %v493, %v469
    %v495 = vsel %vm370, %v57, %v492
    %v496 = vsel %vm370, 0, %v494
    %v497 = vmul.f32 %v495, %v495
    %v498 = vmul.f32 %v497, -0.001358992
    %v499 = vadd.f32 %v498, 0.041655596
    %v500 = vmul.f32 %v497, %v499
    %v501 = vadd.f32 %v500, -0.4999988
    %v502 = vmul.f32 %v497, %v501
    %v503 = vadd.f32 1.0, %v502
    %v504 = vmul.f32 %v495, %v495
    %v505 = vmul.f32 %v504, -0.00019511016
    %v506 = vadd.f32 %v505, 0.008332121
    %v507 = vmul.f32 %v504, %v506
    %v508 = vadd.f32 %v507, -0.16666654
    %v509 = vmul.f32 %v504, %v508
    %v510 = vadd.f32 %v509, 1.0
    %v511 = vmul.f32 %v510, %v495
    %vm512 = vweird.f32 %v57
    %v513 = vand.u32 %v496, 3
    %vm514 = vcmp.lt.s32.totalorder %v513, 2
    %vm515 = vcmp.eq.s32.totalorder %v513, 0
    %v516 = vxor.u32 %v511, 2147483648
    %v517 = vsel %vm515, %v503, %v516
    %vm518 = vcmp.eq.s32.totalorder %v513, 2
    %v519 = vxor.u32 %v503, 2147483648
    %v520 = vsel %vm518, %v519, %v511
    %v521 = vsel %vm514, %v517, %v520
    %v522 = vsel %vm512, nan, %v521
    %v523 = vand.u32 2147483647, %v58
    %vm524 = vcmp.le.f32.partialorder %v523, 0.7853982
    %vm525 = vcmp.lt.s32.totalorder %v58, 0
    %v526 = vand.u32 %v58, 2139095040
    %v527 = vshrl.u32 %v526, 23
    %v528 = vsub.s32 %v527, 127
    %v529 = vand.u32 2147483647, %v58
    %v530 = vand.u32 %v529, 8388607
    %v531 = vor.u32 %v530, 8388608
    %v532 = vsub.s32 0, %v531
    %v533 = vadd.s32 %v528, 1
    %vm534 = vcmp.gt.s32.totalorder %v533, 0
    %v535 = vsel %vm534, %v533, 0
    %v536 = vshrl.u32 %v535, 5
    %v537 = vand.u32 %v535, 31
    %v538 = vsub.s32 32, %v537
    %v539 = vshrl.u32 683565275, %v538
    %v540 = vshll.u32 683565275, %v537
    %v541 = vshrl.u32 2475754826, %v538
    %v542 = vor.u32 %v540, %v541
    %v543 = vshll.u32 2475754826, %v537
    %v544 = vshrl.u32 2131351028, %v538
    %v545 = vor.u32 %v543, %v544
    %v546 = vshll.u32 2131351028, %v537
    %v547 = vshrl.u32 2102212464, %v538
    %v548 = vor.u32 %v546, %v547
    %v549 = vshll.u32 2102212464, %v537
    %v550 = vshrl.u32 920167782, %v538
    %v551 = vor.u32 %v549, %v550
    %v552 = vshll.u32 920167782, %v537
    %v553 = vshrl.u32 1326507024, %v538
    %v554 = vor.u32 %v552, %v553
    %vm555 = vcmp.lt.s32.totalorder %v536, 1
    %vm556 = vcmp.lt.s32.totalorder %v536, 2
    %vm557 = vcmp.lt.s32.totalorder %v536, 3
    %vm558 = vcmp.lt.s32.totalorder %v536, 4
    %v559 = vsel %vm555, %v539, %v542
    %v560 = vsel %vm558, %v548, 2102212464
    %v561 = vsel %vm557, %v545, %v560
    %v562 = vsel %vm556, %v559, %v561
    %v563 = vsel %vm555, %v542, %v545
    %v564 = vsel %vm558, %v551, 920167782
    %v565 = vsel %vm557, %v548, %v564
    %v566 = vsel %vm556, %v563, %v565
    %v567 = vsel %vm555, %v545, %v548
    %v568 = vsel %vm558, %v554, 1326507024
    %v569 = vsel %vm557, %v551, %v568
    %v570 = vsel %vm556, %v567, %v569
    %v571 = vshll.u32 %v531, 8
    %v572 = vand.u32 %v571, 65535
    %v573 = vshrl.u32 %v571, 16
    %v574 = vand.u32 %v570, 65535
    %v575 = vshrl.u32 %v570, 16
    %v576 = vmul.u32 %v572, %v574
    %v577 = vmul.u32 %v572, %v575
    %v578 = vmul.u32 %v573, %v574
    %v579 = vmul.u32 %v573, %v575
    %v580 = vshll.u32 %v577, 16
    %v581 = vshrl.u32 %v577, 16
    %v582 = vshll.u32 %v578, 16
    %v583 = vshrl.u32 %v578, 16
    %vm584 = vc.u32 %v576, %v580
    %v585 = vsel %vm584, 1, 0
    %v586 = vadd.s32 %v576, %v580
    %v587 = vadd.s32 %v579, %v585
    %vm588 = vc.u32 %v586, %v582
    %v589 = vsel %vm588, 1, 0
    %v590 = vadd.s32 %v586, %v582
    %v591 = vadd.s32 %v587, %v589
    %v592 = vadd.s32 %v591, %v581
    %v593 = vadd.s32 %v592, %v583
    %v594 = vand.u32 %v571, 65535
    %v595 = vshrl.u32 %v571, 16
    %v596 = vand.u32 %v566, 65535
    %v597 = vshrl.u32 %v566, 16
    %v598 = vmul.u32 %v594, %v596
    %v599 = vmul.u32 %v594, %v597
    %v600 = vmul.u32 %v595, %v596
    %v601 = vmul.u32 %v595, %v597
    %v602 = vshll.u32 %v599, 16
    %v603 = vshrl.u32 %v599, 16
    %v604 = vshll.u32 %v600, 16
    %v605 = vshrl.u32 %v600, 16
    %vm606 = vc.u32 %v598, %v602
    %v607 = vsel %vm606, 1, 0
    %v608 = vadd.s32 %v598, %v602
    %v609 = vadd.s32 %v601, %v607
    %vm610 = vc.u32 %v608, %v604
    %v611 = vsel %vm610, 1, 0
    %v612 = vadd.s32 %v608, %v604
    %v613 = vadd.s32 %v609, %v611
    %v614 = vadd.s32 %v613, %v603
    %v615 = vadd.s32 %v614, %v605
    %v616 = vmul.u32 %v571, %v562
    %v617 = vadd.s32 %v593, %v612
    %vm618 = vc.u32 %v593, %v612
    %v619 = vadd.s32 %v615, 1
    %v620 = vsel %vm618, %v619, %v615
    %v621 = vadd.s32 %v616, %v620
    %v622 = vadd.s32 %v621, 536870912
    %v623 = vshrl.u32 %v622, 30
    %v624 = vshll.u32 %v623, 30
    %v625 = vsub.s32 %v621, %v624
    %vm626 = vcmp.lt.s32.totalorder %v625, 0
    %v627 = vsub.s32 0, %v625
    %v628 = vsel %vm626, %v627, %v625
    %v629 = vclz %v628
    %v630 = vsub.s32 %v629, 2
    %vm631 = vcmp.gt.s32.totalorder 0, %v630
    %v632 = vsel %vm631, 0, %v630
    %v633 = vsub.s32 32, %v632
    %v634 = vshll.u32 %v625, %v632
    %v635 = vshrl.u32 %v617, %v633
    %v636 = vor.u32 %v634, %v635
    %v637 = vsub.s32 4294967266, %v632
    %v638 = vadd.s32 %v637, 127
    %v639 = vshll.u32 %v638, 23
    %v640 = vor.u32 4788187, %v639
    %v641 = vand.u32 2147483647, %v640
    %v643 = vcvt.s32.f32 %v636
    %v644 = vmul.f32 %v643, %v641
    %v645 = vxor.u32 %v644, 2147483648
    %v646 = vsel %vm525, %v645, %v644
    %v647 = vsub.s32 4, %v623
    %v648 = vsel %vm525, %v647, %v623
    %v649 = vsel %vm524, %v58, %v646
    %v650 = vsel %vm524, 0, %v648
    %v651 = vmul.f32 %v649, %v649
    %v652 = vmul.f32 %v651, -0.001358992
    %v653 = vadd.f32 %v652, 0.041655596
    %v654 = vmul.f32 %v651, %v653
    %v655 = vadd.f32 %v654, -0.4999988
    %v656 = vmul.f32 %v651, %v655
    %v657 = vadd.f32 1.0, %v656
    %v658 = vmul.f32 %v649, %v649
    %v659 = vmul.f32 %v658, -0.00019511016
    %v660 = vadd.f32 %v659, 0.008332121
    %v661 = vmul.f32 %v658, %v660
    %v662 = vadd.f32 %v661, -0.16666654
    %v663 = vmul.f32 %v658, %v662
    %v664 = vadd.f32 %v663, 1.0
    %v665 = vmul.f32 %v664, %v649
    %vm666 = vweird.f32 %v58
    %v667 = vand.u32 %v650, 3
    %vm668 = vcmp.lt.s32.totalorder %v667, 2
    %vm669 = vcmp.eq.s32.totalorder %v667, 0
    %v670 = vxor.u32 %v665, 2147483648
    %v671 = vsel %vm669, %v657, %v670
    %vm672 = vcmp.eq.s32.totalorder %v667, 2
    %v673 = vxor.u32 %v657, 2147483648
    %v674 = vsel %vm672, %v673, %v665
    %v675 = vsel %vm668, %v671, %v674
    %v676 = vsel %vm666, nan, %v675
    %v677 = vld [vmem:[%s2] sm:$0xff]
    %v678 = vld [vmem:[%s2 + $0x8] sm:$0xff]
    %v679 = vld [vmem:[%s2 + $0x10] sm:$0xff]
    %v680 = vld [vmem:[%s2 + $0x18] sm:$0xff]
    %v681 = vld [vmem:[%s2 + $0x20] sm:$0xff]
    %v682 = vld [vmem:[%s2 + $0x28] sm:$0xff]
    %v683 = vld [vmem:[%s2 + $0x30] sm:$0xff]
    %v684 = vld [vmem:[%s2 + $0x38] sm:$0xff]
    %v685 = vld [vmem:[%s2 + $0x40] sm:$0xff]
    %v686 = vld [vmem:[%s2 + $0x48] sm:$0xff]
    %v687 = vld [vmem:[%s2 + $0x50] sm:$0xff]
    %v688 = vld [vmem:[%s2 + $0x58] sm:$0xff]
    %v689 = vld [vmem:[%s2 + $0x60] sm:$0xff]
    %v690 = vld [vmem:[%s2 + $0x68] sm:$0xff]
    %v691 = vld [vmem:[%s2 + $0x70] sm:$0xff]
    %v692 = vld [vmem:[%s2 + $0x78] sm:$0xff]
    %v693 = vld [vmem:[%s3] sm:$0xff]
    %v694 = vld [vmem:[%s3 + $0x8] sm:$0xff]
    %v695 = vld [vmem:[%s3 + $0x10] sm:$0xff]
    %v696 = vld [vmem:[%s3 + $0x18] sm:$0xff]
    %v697 = vld [vmem:[%s3 + $0x20] sm:$0xff]
    %v698 = vld [vmem:[%s3 + $0x28] sm:$0xff]
    %v699 = vld [vmem:[%s3 + $0x30] sm:$0xff]
    %v700 = vld [vmem:[%s3 + $0x38] sm:$0xff]
    %v701 = vld [vmem:[%s3 + $0x40] sm:$0xff]
    %v702 = vld [vmem:[%s3 + $0x48] sm:$0xff]
    %v703 = vld [vmem:[%s3 + $0x50] sm:$0xff]
    %v704 = vld [vmem:[%s3 + $0x58] sm:$0xff]
    %v705 = vld [vmem:[%s3 + $0x60] sm:$0xff]
    %v706 = vld [vmem:[%s3 + $0x68] sm:$0xff]
    %v707 = vld [vmem:[%s3 + $0x70] sm:$0xff]
    %v708 = vld [vmem:[%s3 + $0x78] sm:$0xff]
    %vm709 = vcmask 130048
    %v711 = vsel %vm709, %v693, 0
    %v714 = vsel %vm709, %v694, 0
    %v717 = vsel %vm709, %v695, 0
    %v720 = vsel %vm709, %v696, 0
    %v723 = vsel %vm709, %v697, 0
    %v726 = vsel %vm709, %v698, 0
    %v729 = vsel %vm709, %v699, 0
    %v732 = vsel %vm709, %v700, 0
    %v735 = vsel %vm709, %v701, 0
    %v738 = vsel %vm709, %v702, 0
    %v741 = vsel %vm709, %v703, 0
    %v744 = vsel %vm709, %v704, 0
    %v747 = vsel %vm709, %v705, 0
    %v750 = vsel %vm709, %v706, 0
    %v753 = vsel %vm709, %v707, 0
    %v756 = vsel %vm709, %v708, 0
    %758 = vmatpush.msra.mxu0 0.0
    %759 = vmatpush.msra.mxu0 0.0
    %760 = vmatpush.msra.mxu0 0.0
    %761 = vmatpush.msra.mxu0 0.0
    %762 = vmatpush.msra.mxu0 0.0
    %763 = vmatpush.msra.mxu0 0.0
    %764 = vmatpush.msra.mxu0 0.0
    %765 = vmatpush.msra.mxu0 0.0
    %766 = vmatpush.msra.mxu0 0.0
    %767 = vmatpush.msra.mxu0 0.0
    %768 = vmatpush.msra.mxu0 0.0
    %769 = vmatpush.msra.mxu0 0.0
    %770 = vmatpush.msra.mxu0 0.0
    %771 = vmatpush.msra.mxu0 0.0
    %772 = vmatpush.msra.mxu0 %v676
    %773 = vmatpush.msra.mxu0 %v522
    %774 = vmatmul.f32.gmra.mxu0 %v711
    %v775 = vpop.f32.mrf.mxu0
    %v776 = vadd.f32 0.0, %v775
    %777 = vmatmul.f32.gmra.mxu0 %v714
    %v778 = vpop.f32.mrf.mxu0
    %v779 = vadd.f32 0.0, %v778
    %780 = vmatmul.f32.gmra.mxu0 %v717
    %v781 = vpop.f32.mrf.mxu0
    %v782 = vadd.f32 0.0, %v781
    %783 = vmatmul.f32.gmra.mxu0 %v720
    %v784 = vpop.f32.mrf.mxu0
    %v785 = vadd.f32 0.0, %v784
    %786 = vmatmul.f32.gmra.mxu0 %v723
    %v787 = vpop.f32.mrf.mxu0
    %v788 = vadd.f32 0.0, %v787
    %789 = vmatmul.f32.gmra.mxu0 %v726
    %v790 = vpop.f32.mrf.mxu0
    %v791 = vadd.f32 0.0, %v790
    %792 = vmatmul.f32.gmra.mxu0 %v729
    %v793 = vpop.f32.mrf.mxu0
    %v794 = vadd.f32 0.0, %v793
    %795 = vmatmul.f32.gmra.mxu0 %v732
    %v796 = vpop.f32.mrf.mxu0
    %v797 = vadd.f32 0.0, %v796
    %798 = vmatmul.f32.gmra.mxu0 %v735
    %v799 = vpop.f32.mrf.mxu0
    %v800 = vadd.f32 0.0, %v799
    %801 = vmatmul.f32.gmra.mxu0 %v738
    %v802 = vpop.f32.mrf.mxu0
    %v803 = vadd.f32 0.0, %v802
    %804 = vmatmul.f32.gmra.mxu0 %v741
    %v805 = vpop.f32.mrf.mxu0
    %v806 = vadd.f32 0.0, %v805
    %807 = vmatmul.f32.gmra.mxu0 %v744
    %v808 = vpop.f32.mrf.mxu0
    %v809 = vadd.f32 0.0, %v808
    %810 = vmatmul.f32.gmra.mxu0 %v747
    %v811 = vpop.f32.mrf.mxu0
    %v812 = vadd.f32 0.0, %v811
    %813 = vmatmul.f32.gmra.mxu0 %v750
    %v814 = vpop.f32.mrf.mxu0
    %v815 = vadd.f32 0.0, %v814
    %816 = vmatmul.f32.gmra.mxu0 %v753
    %v817 = vpop.f32.mrf.mxu0
    %v818 = vadd.f32 0.0, %v817
    %819 = vmatmul.f32.gmra.mxu0 %v756
    %v820 = vpop.f32.mrf.mxu0
    %v821 = vadd.f32 0.0, %v820
    %822 = vdwg.mxu0
    %v824 = vsel %vm709, %v677, 0
    %v827 = vsel %vm709, %v678, 0
    %v830 = vsel %vm709, %v679, 0
    %v833 = vsel %vm709, %v680, 0
    %v836 = vsel %vm709, %v681, 0
    %v839 = vsel %vm709, %v682, 0
    %v842 = vsel %vm709, %v683, 0
    %v845 = vsel %vm709, %v684, 0
    %v848 = vsel %vm709, %v685, 0
    %v851 = vsel %vm709, %v686, 0
    %v854 = vsel %vm709, %v687, 0
    %v857 = vsel %vm709, %v688, 0
    %v860 = vsel %vm709, %v689, 0
    %v863 = vsel %vm709, %v690, 0
    %v866 = vsel %vm709, %v691, 0
    %v869 = vsel %vm709, %v692, 0
    %871 = vmatpush.msra.mxu0 0.0
    %872 = vmatpush.msra.mxu0 0.0
    %873 = vmatpush.msra.mxu0 0.0
    %874 = vmatpush.msra.mxu0 0.0
    %875 = vmatpush.msra.mxu0 0.0
    %876 = vmatpush.msra.mxu0 0.0
    %877 = vmatpush.msra.mxu0 0.0
    %878 = vmatpush.msra.mxu0 0.0
    %879 = vmatpush.msra.mxu0 0.0
    %880 = vmatpush.msra.mxu0 0.0
    %881 = vmatpush.msra.mxu0 0.0
    %882 = vmatpush.msra.mxu0 0.0
    %883 = vmatpush.msra.mxu0 0.0
    %884 = vmatpush.msra.mxu0 0.0
    %885 = vmatpush.msra.mxu0 %v368
    %886 = vmatpush.msra.mxu0 %v213
    %887 = vmatmul.f32.gmra.mxu0 %v824
    %v888 = vpop.f32.mrf.mxu0
    %v889 = vadd.f32 %v776, %v888
    %890 = vmatmul.f32.gmra.mxu0 %v827
    %v891 = vpop.f32.mrf.mxu0
    %v892 = vadd.f32 %v779, %v891
    %893 = vmatmul.f32.gmra.mxu0 %v830
    %v894 = vpop.f32.mrf.mxu0
    %v895 = vadd.f32 %v782, %v894
    %896 = vmatmul.f32.gmra.mxu0 %v833
    %v897 = vpop.f32.mrf.mxu0
    %v898 = vadd.f32 %v785, %v897
    %899 = vmatmul.f32.gmra.mxu0 %v836
    %v900 = vpop.f32.mrf.mxu0
    %v901 = vadd.f32 %v788, %v900
    %902 = vmatmul.f32.gmra.mxu0 %v839
    %v903 = vpop.f32.mrf.mxu0
    %v904 = vadd.f32 %v791, %v903
    %905 = vmatmul.f32.gmra.mxu0 %v842
    %v906 = vpop.f32.mrf.mxu0
    %v907 = vadd.f32 %v794, %v906
    %908 = vmatmul.f32.gmra.mxu0 %v845
    %v909 = vpop.f32.mrf.mxu0
    %v910 = vadd.f32 %v797, %v909
    %911 = vmatmul.f32.gmra.mxu0 %v848
    %v912 = vpop.f32.mrf.mxu0
    %v913 = vadd.f32 %v800, %v912
    %914 = vmatmul.f32.gmra.mxu0 %v851
    %v915 = vpop.f32.mrf.mxu0
    %v916 = vadd.f32 %v803, %v915
    %917 = vmatmul.f32.gmra.mxu0 %v854
    %v918 = vpop.f32.mrf.mxu0
    %v919 = vadd.f32 %v806, %v918
    %920 = vmatmul.f32.gmra.mxu0 %v857
    %v921 = vpop.f32.mrf.mxu0
    %v922 = vadd.f32 %v809, %v921
    %923 = vmatmul.f32.gmra.mxu0 %v860
    %v924 = vpop.f32.mrf.mxu0
    %v925 = vadd.f32 %v812, %v924
    %926 = vmatmul.f32.gmra.mxu0 %v863
    %v927 = vpop.f32.mrf.mxu0
    %v928 = vadd.f32 %v815, %v927
    %929 = vmatmul.f32.gmra.mxu0 %v866
    %v930 = vpop.f32.mrf.mxu0
    %v931 = vadd.f32 %v818, %v930
    %932 = vmatmul.f32.gmra.mxu0 %v869
    %v933 = vpop.f32.mrf.mxu0
    %v934 = vadd.f32 %v821, %v933
    %935 = vdwg.mxu0
    %937 = vset.pattern.permute.xlu0 0
    %938 = vperm.xlu0 %937, %v23
    %v939 = vpop.permute.xlu0 %938
    %942 = vset.pattern.permute.xlu0 0
    %943 = vperm.xlu0 %942, %v24
    %v944 = vpop.permute.xlu0 %943
    %947 = vset.pattern.permute.xlu0 0
    %948 = vperm.xlu0 %947, %v25
    %v949 = vpop.permute.xlu0 %948
    %952 = vset.pattern.permute.xlu0 0
    %953 = vperm.xlu0 %952, %v26
    %v954 = vpop.permute.xlu0 %953
    %957 = vset.pattern.permute.xlu0 0
    %958 = vperm.xlu0 %957, %v27
    %v959 = vpop.permute.xlu0 %958
    %962 = vset.pattern.permute.xlu0 0
    %963 = vperm.xlu0 %962, %v28
    %v964 = vpop.permute.xlu0 %963
    %967 = vset.pattern.permute.xlu0 0
    %968 = vperm.xlu0 %967, %v29
    %v969 = vpop.permute.xlu0 %968
    %972 = vset.pattern.permute.xlu0 0
    %973 = vperm.xlu0 %972, %v30
    %v974 = vpop.permute.xlu0 %973
    %977 = vset.pattern.permute.xlu0 0
    %978 = vperm.xlu0 %977, %v31
    %v979 = vpop.permute.xlu0 %978
    %982 = vset.pattern.permute.xlu0 0
    %983 = vperm.xlu0 %982, %v32
    %v984 = vpop.permute.xlu0 %983
    %987 = vset.pattern.permute.xlu0 0
    %988 = vperm.xlu0 %987, %v33
    %v989 = vpop.permute.xlu0 %988
    %992 = vset.pattern.permute.xlu0 0
    %993 = vperm.xlu0 %992, %v34
    %v994 = vpop.permute.xlu0 %993
    %997 = vset.pattern.permute.xlu0 0
    %998 = vperm.xlu0 %997, %v35
    %v999 = vpop.permute.xlu0 %998
    %1002 = vset.pattern.permute.xlu0 0
    %1003 = vperm.xlu0 %1002, %v36
    %v1004 = vpop.permute.xlu0 %1003
    %1007 = vset.pattern.permute.xlu0 0
    %1008 = vperm.xlu0 %1007, %v37
    %v1009 = vpop.permute.xlu0 %1008
    %1012 = vset.pattern.permute.xlu0 0
    %1013 = vperm.xlu0 %1012, %v38
    %v1014 = vpop.permute.xlu0 %1013
    %v1016 = vadd.f32 %v889, %v939
    %v1017 = vadd.f32 %v892, %v944
    %v1018 = vadd.f32 %v895, %v949
    %v1019 = vadd.f32 %v898, %v954
    %v1020 = vadd.f32 %v901, %v959
    %v1021 = vadd.f32 %v904, %v964
    %v1022 = vadd.f32 %v907, %v969
    %v1023 = vadd.f32 %v910, %v974
    %v1024 = vadd.f32 %v913, %v979
    %v1025 = vadd.f32 %v916, %v984
    %v1026 = vadd.f32 %v919, %v989
    %v1027 = vadd.f32 %v922, %v994
    %v1028 = vadd.f32 %v925, %v999
    %v1029 = vadd.f32 %v928, %v1004
    %v1030 = vadd.f32 %v931, %v1009
    %v1031 = vadd.f32 %v934, %v1014
    %v1032 = vmul.f32 %v1016, 0.5
    %v1033 = vmul.f32 %v1017, 0.5
    %v1034 = vmul.f32 %v1018, 0.5
    %v1035 = vmul.f32 %v1019, 0.5
    %v1036 = vmul.f32 %v1020, 0.5
    %v1037 = vmul.f32 %v1021, 0.5
    %v1038 = vmul.f32 %v1022, 0.5
    %v1039 = vmul.f32 %v1023, 0.5
    %v1040 = vmul.f32 %v1024, 0.5
    %v1041 = vmul.f32 %v1025, 0.5
    %v1042 = vmul.f32 %v1026, 0.5
    %v1043 = vmul.f32 %v1027, 0.5
    %v1044 = vmul.f32 %v1028, 0.5
    %v1045 = vmul.f32 %v1029, 0.5
    %v1046 = vmul.f32 %v1030, 0.5
    %v1047 = vmul.f32 %v1031, 0.5
    %v1048 = vmul.f32 %v1016, 0.70710677
    %v1049 = vmul.f32 %v1017, 0.70710677
    %v1050 = vmul.f32 %v1018, 0.70710677
    %v1051 = vmul.f32 %v1019, 0.70710677
    %v1052 = vmul.f32 %v1020, 0.70710677
    %v1053 = vmul.f32 %v1021, 0.70710677
    %v1054 = vmul.f32 %v1022, 0.70710677
    %v1055 = vmul.f32 %v1023, 0.70710677
    %v1056 = vmul.f32 %v1024, 0.70710677
    %v1057 = vmul.f32 %v1025, 0.70710677
    %v1058 = vmul.f32 %v1026, 0.70710677
    %v1059 = vmul.f32 %v1027, 0.70710677
    %v1060 = vmul.f32 %v1028, 0.70710677
    %v1061 = vmul.f32 %v1029, 0.70710677
    %v1062 = vmul.f32 %v1030, 0.70710677
    %v1063 = vmul.f32 %v1031, 0.70710677
    %v1064 = vmul.f32 %v1048, %v1048
    %v1065 = vmin.f32 16.0, %v1064
    %v1066 = vmul.f32 %v1065, 2.1237322e-06
    %v1067 = vadd.f32 %v1066, 0.00028619796
    %v1068 = vmul.f32 %v1065, %v1067
    %v1069 = vadd.f32 %v1068, 0.0036580483
    %v1070 = vmul.f32 %v1065, %v1069
    %v1071 = vadd.f32 %v1070, 0.05243302
    %v1072 = vmul.f32 %v1065, %v1071
    %v1073 = vadd.f32 %v1072, 0.18741608
    %v1074 = vmul.f32 %v1065, %v1073
    %v1075 = vadd.f32 %v1074, 1.1283791
    %v1076 = vmul.f32 %v1048, %v1075
    %v1077 = vmul.f32 %v1065, 3.8918573e-05
    %v1078 = vadd.f32 %v1077, 0.001143296
    %v1079 = vmul.f32 %v1065, %v1078
    %v1080 = vadd.f32 %v1079, 0.014752088
    %v1081 = vmul.f32 %v1065, %v1080
    %v1082 = vadd.f32 %v1081, 0.112945676
    %v1083 = vmul.f32 %v1065, %v1082
    %v1084 = vadd.f32 %v1083, 0.4994258
    %v1085 = vmul.f32 %v1065, %v1084
    %v1086 = vadd.f32 %v1085, 1.0
    %v1087 = vrcp.pop %v1086
    %v1088 = vmul.f32 %v1086, %v1087
    %v1089 = vsub.f32 1.0, %v1088
    %v1090 = vmul.f32 %v1087, %v1089
    %v1091 = vadd.f32 %v1087, %v1090
    %vm1092 = vweird.f32 %v1086
    %vm1093 = vweird.f32 %v1087
    %vm1094 = vmor %vm1092, %vm1093
    %v1095 = vsel %vm1094, %v1087, %v1091
    %v1096 = vand.u32 2147483647, %v1086
    %vm1097 = vcmp.eq.f32.partialorder %v1096, 8.507059e+37
    %v1098 = vand.u32 %v1086, 2147483648
    %v1099 = vor.u32 1.1754944e-38, %v1098
    %v1100 = vsel %vm1097, %v1099, %v1095
    %v1101 = vmul.f32 %v1076, %v1100
    %v1102 = vmin.f32 %v1101, 1.0
    %v1103 = vmax.f32 %v1102, -1.0
    %v1104 = vmul.f32 %v1049, %v1049
    %v1105 = vmin.f32 16.0, %v1104
    %v1106 = vmul.f32 %v1105, 2.1237322e-06
    %v1107 = vadd.f32 %v1106, 0.00028619796
    %v1108 = vmul.f32 %v1105, %v1107
    %v1109 = vadd.f32 %v1108, 0.0036580483
    %v1110 = vmul.f32 %v1105, %v1109
    %v1111 = vadd.f32 %v1110, 0.05243302
    %v1112 = vmul.f32 %v1105, %v1111
    %v1113 = vadd.f32 %v1112, 0.18741608
    %v1114 = vmul.f32 %v1105, %v1113
    %v1115 = vadd.f32 %v1114, 1.1283791
    %v1116 = vmul.f32 %v1049, %v1115
    %v1117 = vmul.f32 %v1105, 3.8918573e-05
    %v1118 = vadd.f32 %v1117, 0.001143296
    %v1119 = vmul.f32 %v1105, %v1118
    %v1120 = vadd.f32 %v1119, 0.014752088
    %v1121 = vmul.f32 %v1105, %v1120
    %v1122 = vadd.f32 %v1121, 0.112945676
    %v1123 = vmul.f32 %v1105, %v1122
    %v1124 = vadd.f32 %v1123, 0.4994258
    %v1125 = vmul.f32 %v1105, %v1124
    %v1126 = vadd.f32 %v1125, 1.0
    %v1127 = vrcp.pop %v1126
    %v1128 = vmul.f32 %v1126, %v1127
    %v1129 = vsub.f32 1.0, %v1128
    %v1130 = vmul.f32 %v1127, %v1129
    %v1131 = vadd.f32 %v1127, %v1130
    %vm1132 = vweird.f32 %v1126
    %vm1133 = vweird.f32 %v1127
    %vm1134 = vmor %vm1132, %vm1133
    %v1135 = vsel %vm1134, %v1127, %v1131
    %v1136 = vand.u32 2147483647, %v1126
    %vm1137 = vcmp.eq.f32.partialorder %v1136, 8.507059e+37
    %v1138 = vand.u32 %v1126, 2147483648
    %v1139 = vor.u32 1.1754944e-38, %v1138
    %v1140 = vsel %vm1137, %v1139, %v1135
    %v1141 = vmul.f32 %v1116, %v1140
    %v1142 = vmin.f32 %v1141, 1.0
    %v1143 = vmax.f32 %v1142, -1.0
    %v1144 = vmul.f32 %v1050, %v1050
    %v1145 = vmin.f32 16.0, %v1144
    %v1146 = vmul.f32 %v1145, 2.1237322e-06
    %v1147 = vadd.f32 %v1146, 0.00028619796
    %v1148 = vmul.f32 %v1145, %v1147
    %v1149 = vadd.f32 %v1148, 0.0036580483
    %v1150 = vmul.f32 %v1145, %v1149
    %v1151 = vadd.f32 %v1150, 0.05243302
    %v1152 = vmul.f32 %v1145, %v1151
    %v1153 = vadd.f32 %v1152, 0.18741608
    %v1154 = vmul.f32 %v1145, %v1153
    %v1155 = vadd.f32 %v1154, 1.1283791
    %v1156 = vmul.f32 %v1050, %v1155
    %v1157 = vmul.f32 %v1145, 3.8918573e-05
    %v1158 = vadd.f32 %v1157, 0.001143296
    %v1159 = vmul.f32 %v1145, %v1158
    %v1160 = vadd.f32 %v1159, 0.014752088
    %v1161 = vmul.f32 %v1145, %v1160
    %v1162 = vadd.f32 %v1161, 0.112945676
    %v1163 = vmul.f32 %v1145, %v1162
    %v1164 = vadd.f32 %v1163, 0.4994258
    %v1165 = vmul.f32 %v1145, %v1164
    %v1166 = vadd.f32 %v1165, 1.0
    %v1167 = vrcp.pop %v1166
    %v1168 = vmul.f32 %v1166, %v1167
    %v1169 = vsub.f32 1.0, %v1168
    %v1170 = vmul.f32 %v1167, %v1169
    %v1171 = vadd.f32 %v1167, %v1170
    %vm1172 = vweird.f32 %v1166
    %vm1173 = vweird.f32 %v1167
    %vm1174 = vmor %vm1172, %vm1173
    %v1175 = vsel %vm1174, %v1167, %v1171
    %v1176 = vand.u32 2147483647, %v1166
    %vm1177 = vcmp.eq.f32.partialorder %v1176, 8.507059e+37
    %v1178 = vand.u32 %v1166, 2147483648
    %v1179 = vor.u32 1.1754944e-38, %v1178
    %v1180 = vsel %vm1177, %v1179, %v1175
    %v1181 = vmul.f32 %v1156, %v1180
    %v1182 = vmin.f32 %v1181, 1.0
    %v1183 = vmax.f32 %v1182, -1.0
    %v1184 = vmul.f32 %v1051, %v1051
    %v1185 = vmin.f32 16.0, %v1184
    %v1186 = vmul.f32 %v1185, 2.1237322e-06
    %v1187 = vadd.f32 %v1186, 0.00028619796
    %v1188 = vmul.f32 %v1185, %v1187
    %v1189 = vadd.f32 %v1188, 0.0036580483
    %v1190 = vmul.f32 %v1185, %v1189
    %v1191 = vadd.f32 %v1190, 0.05243302
    %v1192 = vmul.f32 %v1185, %v1191
    %v1193 = vadd.f32 %v1192, 0.18741608
    %v1194 = vmul.f32 %v1185, %v1193
    %v1195 = vadd.f32 %v1194, 1.1283791
    %v1196 = vmul.f32 %v1051, %v1195
    %v1197 = vmul.f32 %v1185, 3.8918573e-05
    %v1198 = vadd.f32 %v1197, 0.001143296
    %v1199 = vmul.f32 %v1185, %v1198
    %v1200 = vadd.f32 %v1199, 0.014752088
    %v1201 = vmul.f32 %v1185, %v1200
    %v1202 = vadd.f32 %v1201, 0.112945676
    %v1203 = vmul.f32 %v1185, %v1202
    %v1204 = vadd.f32 %v1203, 0.4994258
    %v1205 = vmul.f32 %v1185, %v1204
    %v1206 = vadd.f32 %v1205, 1.0
    %v1207 = vrcp.pop %v1206
    %v1208 = vmul.f32 %v1206, %v1207
    %v1209 = vsub.f32 1.0, %v1208
    %v1210 = vmul.f32 %v1207, %v1209
    %v1211 = vadd.f32 %v1207, %v1210
    %vm1212 = vweird.f32 %v1206
    %vm1213 = vweird.f32 %v1207
    %vm1214 = vmor %vm1212, %vm1213
    %v1215 = vsel %vm1214, %v1207, %v1211
    %v1216 = vand.u32 2147483647, %v1206
    %vm1217 = vcmp.eq.f32.partialorder %v1216, 8.507059e+37
    %v1218 = vand.u32 %v1206, 2147483648
    %v1219 = vor.u32 1.1754944e-38, %v1218
    %v1220 = vsel %vm1217, %v1219, %v1215
    %v1221 = vmul.f32 %v1196, %v1220
    %v1222 = vmin.f32 %v1221, 1.0
    %v1223 = vmax.f32 %v1222, -1.0
    %v1224 = vmul.f32 %v1052, %v1052
    %v1225 = vmin.f32 16.0, %v1224
    %v1226 = vmul.f32 %v1225, 2.1237322e-06
    %v1227 = vadd.f32 %v1226, 0.00028619796
    %v1228 = vmul.f32 %v1225, %v1227
    %v1229 = vadd.f32 %v1228, 0.0036580483
    %v1230 = vmul.f32 %v1225, %v1229
    %v1231 = vadd.f32 %v1230, 0.05243302
    %v1232 = vmul.f32 %v1225, %v1231
    %v1233 = vadd.f32 %v1232, 0.18741608
    %v1234 = vmul.f32 %v1225, %v1233
    %v1235 = vadd.f32 %v1234, 1.1283791
    %v1236 = vmul.f32 %v1052, %v1235
    %v1237 = vmul.f32 %v1225, 3.8918573e-05
    %v1238 = vadd.f32 %v1237, 0.001143296
    %v1239 = vmul.f32 %v1225, %v1238
    %v1240 = vadd.f32 %v1239, 0.014752088
    %v1241 = vmul.f32 %v1225, %v1240
    %v1242 = vadd.f32 %v1241, 0.112945676
    %v1243 = vmul.f32 %v1225, %v1242
    %v1244 = vadd.f32 %v1243, 0.4994258
    %v1245 = vmul.f32 %v1225, %v1244
    %v1246 = vadd.f32 %v1245, 1.0
    %v1247 = vrcp.pop %v1246
    %v1248 = vmul.f32 %v1246, %v1247
    %v1249 = vsub.f32 1.0, %v1248
    %v1250 = vmul.f32 %v1247, %v1249
    %v1251 = vadd.f32 %v1247, %v1250
    %vm1252 = vweird.f32 %v1246
    %vm1253 = vweird.f32 %v1247
    %vm1254 = vmor %vm1252, %vm1253
    %v1255 = vsel %vm1254, %v1247, %v1251
    %v1256 = vand.u32 2147483647, %v1246
    %vm1257 = vcmp.eq.f32.partialorder %v1256, 8.507059e+37
    %v1258 = vand.u32 %v1246, 2147483648
    %v1259 = vor.u32 1.1754944e-38, %v1258
    %v1260 = vsel %vm1257, %v1259, %v1255
    %v1261 = vmul.f32 %v1236, %v1260
    %v1262 = vmin.f32 %v1261, 1.0
    %v1263 = vmax.f32 %v1262, -1.0
    %v1264 = vmul.f32 %v1053, %v1053
    %v1265 = vmin.f32 16.0, %v1264
    %v1266 = vmul.f32 %v1265, 2.1237322e-06
    %v1267 = vadd.f32 %v1266, 0.00028619796
    %v1268 = vmul.f32 %v1265, %v1267
    %v1269 = vadd.f32 %v1268, 0.0036580483
    %v1270 = vmul.f32 %v1265, %v1269
    %v1271 = vadd.f32 %v1270, 0.05243302
    %v1272 = vmul.f32 %v1265, %v1271
    %v1273 = vadd.f32 %v1272, 0.18741608
    %v1274 = vmul.f32 %v1265, %v1273
    %v1275 = vadd.f32 %v1274, 1.1283791
    %v1276 = vmul.f32 %v1053, %v1275
    %v1277 = vmul.f32 %v1265, 3.8918573e-05
    %v1278 = vadd.f32 %v1277, 0.001143296
    %v1279 = vmul.f32 %v1265, %v1278
    %v1280 = vadd.f32 %v1279, 0.014752088
    %v1281 = vmul.f32 %v1265, %v1280
    %v1282 = vadd.f32 %v1281, 0.112945676
    %v1283 = vmul.f32 %v1265, %v1282
    %v1284 = vadd.f32 %v1283, 0.4994258
    %v1285 = vmul.f32 %v1265, %v1284
    %v1286 = vadd.f32 %v1285, 1.0
    %v1287 = vrcp.pop %v1286
    %v1288 = vmul.f32 %v1286, %v1287
    %v1289 = vsub.f32 1.0, %v1288
    %v1290 = vmul.f32 %v1287, %v1289
    %v1291 = vadd.f32 %v1287, %v1290
    %vm1292 = vweird.f32 %v1286
    %vm1293 = vweird.f32 %v1287
    %vm1294 = vmor %vm1292, %vm1293
    %v1295 = vsel %vm1294, %v1287, %v1291
    %v1296 = vand.u32 2147483647, %v1286
    %vm1297 = vcmp.eq.f32.partialorder %v1296, 8.507059e+37
    %v1298 = vand.u32 %v1286, 2147483648
    %v1299 = vor.u32 1.1754944e-38, %v1298
    %v1300 = vsel %vm1297, %v1299, %v1295
    %v1301 = vmul.f32 %v1276, %v1300
    %v1302 = vmin.f32 %v1301, 1.0
    %v1303 = vmax.f32 %v1302, -1.0
    %v1304 = vmul.f32 %v1054, %v1054
    %v1305 = vmin.f32 16.0, %v1304
    %v1306 = vmul.f32 %v1305, 2.1237322e-06
    %v1307 = vadd.f32 %v1306, 0.00028619796
    %v1308 = vmul.f32 %v1305, %v1307
    %v1309 = vadd.f32 %v1308, 0.0036580483
    %v1310 = vmul.f32 %v1305, %v1309
    %v1311 = vadd.f32 %v1310, 0.05243302
    %v1312 = vmul.f32 %v1305, %v1311
    %v1313 = vadd.f32 %v1312, 0.18741608
    %v1314 = vmul.f32 %v1305, %v1313
    %v1315 = vadd.f32 %v1314, 1.1283791
    %v1316 = vmul.f32 %v1054, %v1315
    %v1317 = vmul.f32 %v1305, 3.8918573e-05
    %v1318 = vadd.f32 %v1317, 0.001143296
    %v1319 = vmul.f32 %v1305, %v1318
    %v1320 = vadd.f32 %v1319, 0.014752088
    %v1321 = vmul.f32 %v1305, %v1320
    %v1322 = vadd.f32 %v1321, 0.112945676
    %v1323 = vmul.f32 %v1305, %v1322
    %v1324 = vadd.f32 %v1323, 0.4994258
    %v1325 = vmul.f32 %v1305, %v1324
    %v1326 = vadd.f32 %v1325, 1.0
    %v1327 = vrcp.pop %v1326
    %v1328 = vmul.f32 %v1326, %v1327
    %v1329 = vsub.f32 1.0, %v1328
    %v1330 = vmul.f32 %v1327, %v1329
    %v1331 = vadd.f32 %v1327, %v1330
    %vm1332 = vweird.f32 %v1326
    %vm1333 = vweird.f32 %v1327
    %vm1334 = vmor %vm1332, %vm1333
    %v1335 = vsel %vm1334, %v1327, %v1331
    %v1336 = vand.u32 2147483647, %v1326
    %vm1337 = vcmp.eq.f32.partialorder %v1336, 8.507059e+37
    %v1338 = vand.u32 %v1326, 2147483648
    %v1339 = vor.u32 1.1754944e-38, %v1338
    %v1340 = vsel %vm1337, %v1339, %v1335
    %v1341 = vmul.f32 %v1316, %v1340
    %v1342 = vmin.f32 %v1341, 1.0
    %v1343 = vmax.f32 %v1342, -1.0
    %v1344 = vmul.f32 %v1055, %v1055
    %v1345 = vmin.f32 16.0, %v1344
    %v1346 = vmul.f32 %v1345, 2.1237322e-06
    %v1347 = vadd.f32 %v1346, 0.00028619796
    %v1348 = vmul.f32 %v1345, %v1347
    %v1349 = vadd.f32 %v1348, 0.0036580483
    %v1350 = vmul.f32 %v1345, %v1349
    %v1351 = vadd.f32 %v1350, 0.05243302
    %v1352 = vmul.f32 %v1345, %v1351
    %v1353 = vadd.f32 %v1352, 0.18741608
    %v1354 = vmul.f32 %v1345, %v1353
    %v1355 = vadd.f32 %v1354, 1.1283791
    %v1356 = vmul.f32 %v1055, %v1355
    %v1357 = vmul.f32 %v1345, 3.8918573e-05
    %v1358 = vadd.f32 %v1357, 0.001143296
    %v1359 = vmul.f32 %v1345, %v1358
    %v1360 = vadd.f32 %v1359, 0.014752088
    %v1361 = vmul.f32 %v1345, %v1360
    %v1362 = vadd.f32 %v1361, 0.112945676
    %v1363 = vmul.f32 %v1345, %v1362
    %v1364 = vadd.f32 %v1363, 0.4994258
    %v1365 = vmul.f32 %v1345, %v1364
    %v1366 = vadd.f32 %v1365, 1.0
    %v1367 = vrcp.pop %v1366
    %v1368 = vmul.f32 %v1366, %v1367
    %v1369 = vsub.f32 1.0, %v1368
    %v1370 = vmul.f32 %v1367, %v1369
    %v1371 = vadd.f32 %v1367, %v1370
    %vm1372 = vweird.f32 %v1366
    %vm1373 = vweird.f32 %v1367
    %vm1374 = vmor %vm1372, %vm1373
    %v1375 = vsel %vm1374, %v1367, %v1371
    %v1376 = vand.u32 2147483647, %v1366
    %vm1377 = vcmp.eq.f32.partialorder %v1376, 8.507059e+37
    %v1378 = vand.u32 %v1366, 2147483648
    %v1379 = vor.u32 1.1754944e-38, %v1378
    %v1380 = vsel %vm1377, %v1379, %v1375
    %v1381 = vmul.f32 %v1356, %v1380
    %v1382 = vmin.f32 %v1381, 1.0
    %v1383 = vmax.f32 %v1382, -1.0
    %v1384 = vmul.f32 %v1056, %v1056
    %v1385 = vmin.f32 16.0, %v1384
    %v1386 = vmul.f32 %v1385, 2.1237322e-06
    %v1387 = vadd.f32 %v1386, 0.00028619796
    %v1388 = vmul.f32 %v1385, %v1387
    %v1389 = vadd.f32 %v1388, 0.0036580483
    %v1390 = vmul.f32 %v1385, %v1389
    %v1391 = vadd.f32 %v1390, 0.05243302
    %v1392 = vmul.f32 %v1385, %v1391
    %v1393 = vadd.f32 %v1392, 0.18741608
    %v1394 = vmul.f32 %v1385, %v1393
    %v1395 = vadd.f32 %v1394, 1.1283791
    %v1396 = vmul.f32 %v1056, %v1395
    %v1397 = vmul.f32 %v1385, 3.8918573e-05
    %v1398 = vadd.f32 %v1397, 0.001143296
    %v1399 = vmul.f32 %v1385, %v1398
    %v1400 = vadd.f32 %v1399, 0.014752088
    %v1401 = vmul.f32 %v1385, %v1400
    %v1402 = vadd.f32 %v1401, 0.112945676
    %v1403 = vmul.f32 %v1385, %v1402
    %v1404 = vadd.f32 %v1403, 0.4994258
    %v1405 = vmul.f32 %v1385, %v1404
    %v1406 = vadd.f32 %v1405, 1.0
    %v1407 = vrcp.pop %v1406
    %v1408 = vmul.f32 %v1406, %v1407
    %v1409 = vsub.f32 1.0, %v1408
    %v1410 = vmul.f32 %v1407, %v1409
    %v1411 = vadd.f32 %v1407, %v1410
    %vm1412 = vweird.f32 %v1406
    %vm1413 = vweird.f32 %v1407
    %vm1414 = vmor %vm1412, %vm1413
    %v1415 = vsel %vm1414, %v1407, %v1411
    %v1416 = vand.u32 2147483647, %v1406
    %vm1417 = vcmp.eq.f32.partialorder %v1416, 8.507059e+37
    %v1418 = vand.u32 %v1406, 2147483648
    %v1419 = vor.u32 1.1754944e-38, %v1418
    %v1420 = vsel %vm1417, %v1419, %v1415
    %v1421 = vmul.f32 %v1396, %v1420
    %v1422 = vmin.f32 %v1421, 1.0
    %v1423 = vmax.f32 %v1422, -1.0
    %v1424 = vmul.f32 %v1057, %v1057
    %v1425 = vmin.f32 16.0, %v1424
    %v1426 = vmul.f32 %v1425, 2.1237322e-06
    %v1427 = vadd.f32 %v1426, 0.00028619796
    %v1428 = vmul.f32 %v1425, %v1427
    %v1429 = vadd.f32 %v1428, 0.0036580483
    %v1430 = vmul.f32 %v1425, %v1429
    %v1431 = vadd.f32 %v1430, 0.05243302
    %v1432 = vmul.f32 %v1425, %v1431
    %v1433 = vadd.f32 %v1432, 0.18741608
    %v1434 = vmul.f32 %v1425, %v1433
    %v1435 = vadd.f32 %v1434, 1.1283791
    %v1436 = vmul.f32 %v1057, %v1435
    %v1437 = vmul.f32 %v1425, 3.8918573e-05
    %v1438 = vadd.f32 %v1437, 0.001143296
    %v1439 = vmul.f32 %v1425, %v1438
    %v1440 = vadd.f32 %v1439, 0.014752088
    %v1441 = vmul.f32 %v1425, %v1440
    %v1442 = vadd.f32 %v1441, 0.112945676
    %v1443 = vmul.f32 %v1425, %v1442
    %v1444 = vadd.f32 %v1443, 0.4994258
    %v1445 = vmul.f32 %v1425, %v1444
    %v1446 = vadd.f32 %v1445, 1.0
    %v1447 = vrcp.pop %v1446
    %v1448 = vmul.f32 %v1446, %v1447
    %v1449 = vsub.f32 1.0, %v1448
    %v1450 = vmul.f32 %v1447, %v1449
    %v1451 = vadd.f32 %v1447, %v1450
    %vm1452 = vweird.f32 %v1446
    %vm1453 = vweird.f32 %v1447
    %vm1454 = vmor %vm1452, %vm1453
    %v1455 = vsel %vm1454, %v1447, %v1451
    %v1456 = vand.u32 2147483647, %v1446
    %vm1457 = vcmp.eq.f32.partialorder %v1456, 8.507059e+37
    %v1458 = vand.u32 %v1446, 2147483648
    %v1459 = vor.u32 1.1754944e-38, %v1458
    %v1460 = vsel %vm1457, %v1459, %v1455
    %v1461 = vmul.f32 %v1436, %v1460
    %v1462 = vmin.f32 %v1461, 1.0
    %v1463 = vmax.f32 %v1462, -1.0
    %v1464 = vmul.f32 %v1058, %v1058
    %v1465 = vmin.f32 16.0, %v1464
    %v1466 = vmul.f32 %v1465, 2.1237322e-06
    %v1467 = vadd.f32 %v1466, 0.00028619796
    %v1468 = vmul.f32 %v1465, %v1467
    %v1469 = vadd.f32 %v1468, 0.0036580483
    %v1470 = vmul.f32 %v1465, %v1469
    %v1471 = vadd.f32 %v1470, 0.05243302
    %v1472 = vmul.f32 %v1465, %v1471
    %v1473 = vadd.f32 %v1472, 0.18741608
    %v1474 = vmul.f32 %v1465, %v1473
    %v1475 = vadd.f32 %v1474, 1.1283791
    %v1476 = vmul.f32 %v1058, %v1475
    %v1477 = vmul.f32 %v1465, 3.8918573e-05
    %v1478 = vadd.f32 %v1477, 0.001143296
    %v1479 = vmul.f32 %v1465, %v1478
    %v1480 = vadd.f32 %v1479, 0.014752088
    %v1481 = vmul.f32 %v1465, %v1480
    %v1482 = vadd.f32 %v1481, 0.112945676
    %v1483 = vmul.f32 %v1465, %v1482
    %v1484 = vadd.f32 %v1483, 0.4994258
    %v1485 = vmul.f32 %v1465, %v1484
    %v1486 = vadd.f32 %v1485, 1.0
    %v1487 = vrcp.pop %v1486
    %v1488 = vmul.f32 %v1486, %v1487
    %v1489 = vsub.f32 1.0, %v1488
    %v1490 = vmul.f32 %v1487, %v1489
    %v1491 = vadd.f32 %v1487, %v1490
    %vm1492 = vweird.f32 %v1486
    %vm1493 = vweird.f32 %v1487
    %vm1494 = vmor %vm1492, %vm1493
    %v1495 = vsel %vm1494, %v1487, %v1491
    %v1496 = vand.u32 2147483647, %v1486
    %vm1497 = vcmp.eq.f32.partialorder %v1496, 8.507059e+37
    %v1498 = vand.u32 %v1486, 2147483648
    %v1499 = vor.u32 1.1754944e-38, %v1498
    %v1500 = vsel %vm1497, %v1499, %v1495
    %v1501 = vmul.f32 %v1476, %v1500
    %v1502 = vmin.f32 %v1501, 1.0
    %v1503 = vmax.f32 %v1502, -1.0
    %v1504 = vmul.f32 %v1059, %v1059
    %v1505 = vmin.f32 16.0, %v1504
    %v1506 = vmul.f32 %v1505, 2.1237322e-06
    %v1507 = vadd.f32 %v1506, 0.00028619796
    %v1508 = vmul.f32 %v1505, %v1507
    %v1509 = vadd.f32 %v1508, 0.0036580483
    %v1510 = vmul.f32 %v1505, %v1509
    %v1511 = vadd.f32 %v1510, 0.05243302
    %v1512 = vmul.f32 %v1505, %v1511
    %v1513 = vadd.f32 %v1512, 0.18741608
    %v1514 = vmul.f32 %v1505, %v1513
    %v1515 = vadd.f32 %v1514, 1.1283791
    %v1516 = vmul.f32 %v1059, %v1515
    %v1517 = vmul.f32 %v1505, 3.8918573e-05
    %v1518 = vadd.f32 %v1517, 0.001143296
    %v1519 = vmul.f32 %v1505, %v1518
    %v1520 = vadd.f32 %v1519, 0.014752088
    %v1521 = vmul.f32 %v1505, %v1520
    %v1522 = vadd.f32 %v1521, 0.112945676
    %v1523 = vmul.f32 %v1505, %v1522
    %v1524 = vadd.f32 %v1523, 0.4994258
    %v1525 = vmul.f32 %v1505, %v1524
    %v1526 = vadd.f32 %v1525, 1.0
    %v1527 = vrcp.pop %v1526
    %v1528 = vmul.f32 %v1526, %v1527
    %v1529 = vsub.f32 1.0, %v1528
    %v1530 = vmul.f32 %v1527, %v1529
    %v1531 = vadd.f32 %v1527, %v1530
    %vm1532 = vweird.f32 %v1526
    %vm1533 = vweird.f32 %v1527
    %vm1534 = vmor %vm1532, %vm1533
    %v1535 = vsel %vm1534, %v1527, %v1531
    %v1536 = vand.u32 2147483647, %v1526
    %vm1537 = vcmp.eq.f32.partialorder %v1536, 8.507059e+37
    %v1538 = vand.u32 %v1526, 2147483648
    %v1539 = vor.u32 1.1754944e-38, %v1538
    %v1540 = vsel %vm1537, %v1539, %v1535
    %v1541 = vmul.f32 %v1516, %v1540
    %v1542 = vmin.f32 %v1541, 1.0
    %v1543 = vmax.f32 %v1542, -1.0
    %v1544 = vmul.f32 %v1060, %v1060
    %v1545 = vmin.f32 16.0, %v1544
    %v1546 = vmul.f32 %v1545, 2.1237322e-06
    %v1547 = vadd.f32 %v1546, 0.00028619796
    %v1548 = vmul.f32 %v1545, %v1547
    %v1549 = vadd.f32 %v1548, 0.0036580483
    %v1550 = vmul.f32 %v1545, %v1549
    %v1551 = vadd.f32 %v1550, 0.05243302
    %v1552 = vmul.f32 %v1545, %v1551
    %v1553 = vadd.f32 %v1552, 0.18741608
    %v1554 = vmul.f32 %v1545, %v1553
    %v1555 = vadd.f32 %v1554, 1.1283791
    %v1556 = vmul.f32 %v1060, %v1555
    %v1557 = vmul.f32 %v1545, 3.8918573e-05
    %v1558 = vadd.f32 %v1557, 0.001143296
    %v1559 = vmul.f32 %v1545, %v1558
    %v1560 = vadd.f32 %v1559, 0.014752088
    %v1561 = vmul.f32 %v1545, %v1560
    %v1562 = vadd.f32 %v1561, 0.112945676
    %v1563 = vmul.f32 %v1545, %v1562
    %v1564 = vadd.f32 %v1563, 0.4994258
    %v1565 = vmul.f32 %v1545, %v1564
    %v1566 = vadd.f32 %v1565, 1.0
    %v1567 = vrcp.pop %v1566
    %v1568 = vmul.f32 %v1566, %v1567
    %v1569 = vsub.f32 1.0, %v1568
    %v1570 = vmul.f32 %v1567, %v1569
    %v1571 = vadd.f32 %v1567, %v1570
    %vm1572 = vweird.f32 %v1566
    %vm1573 = vweird.f32 %v1567
    %vm1574 = vmor %vm1572, %vm1573
    %v1575 = vsel %vm1574, %v1567, %v1571
    %v1576 = vand.u32 2147483647, %v1566
    %vm1577 = vcmp.eq.f32.partialorder %v1576, 8.507059e+37
    %v1578 = vand.u32 %v1566, 2147483648
    %v1579 = vor.u32 1.1754944e-38, %v1578
    %v1580 = vsel %vm1577, %v1579, %v1575
    %v1581 = vmul.f32 %v1556, %v1580
    %v1582 = vmin.f32 %v1581, 1.0
    %v1583 = vmax.f32 %v1582, -1.0
    %v1584 = vmul.f32 %v1061, %v1061
    %v1585 = vmin.f32 16.0, %v1584
    %v1586 = vmul.f32 %v1585, 2.1237322e-06
    %v1587 = vadd.f32 %v1586, 0.00028619796
    %v1588 = vmul.f32 %v1585, %v1587
    %v1589 = vadd.f32 %v1588, 0.0036580483
    %v1590 = vmul.f32 %v1585, %v1589
    %v1591 = vadd.f32 %v1590, 0.05243302
    %v1592 = vmul.f32 %v1585, %v1591
    %v1593 = vadd.f32 %v1592, 0.18741608
    %v1594 = vmul.f32 %v1585, %v1593
    %v1595 = vadd.f32 %v1594, 1.1283791
    %v1596 = vmul.f32 %v1061, %v1595
    %v1597 = vmul.f32 %v1585, 3.8918573e-05
    %v1598 = vadd.f32 %v1597, 0.001143296
    %v1599 = vmul.f32 %v1585, %v1598
    %v1600 = vadd.f32 %v1599, 0.014752088
    %v1601 = vmul.f32 %v1585, %v1600
    %v1602 = vadd.f32 %v1601, 0.112945676
    %v1603 = vmul.f32 %v1585, %v1602
    %v1604 = vadd.f32 %v1603, 0.4994258
    %v1605 = vmul.f32 %v1585, %v1604
    %v1606 = vadd.f32 %v1605, 1.0
    %v1607 = vrcp.pop %v1606
    %v1608 = vmul.f32 %v1606, %v1607
    %v1609 = vsub.f32 1.0, %v1608
    %v1610 = vmul.f32 %v1607, %v1609
    %v1611 = vadd.f32 %v1607, %v1610
    %vm1612 = vweird.f32 %v1606
    %vm1613 = vweird.f32 %v1607
    %vm1614 = vmor %vm1612, %vm1613
    %v1615 = vsel %vm1614, %v1607, %v1611
    %v1616 = vand.u32 2147483647, %v1606
    %vm1617 = vcmp.eq.f32.partialorder %v1616, 8.507059e+37
    %v1618 = vand.u32 %v1606, 2147483648
    %v1619 = vor.u32 1.1754944e-38, %v1618
    %v1620 = vsel %vm1617, %v1619, %v1615
    %v1621 = vmul.f32 %v1596, %v1620
    %v1622 = vmin.f32 %v1621, 1.0
    %v1623 = vmax.f32 %v1622, -1.0
    %v1624 = vmul.f32 %v1062, %v1062
    %v1625 = vmin.f32 16.0, %v1624
    %v1626 = vmul.f32 %v1625, 2.1237322e-06
    %v1627 = vadd.f32 %v1626, 0.00028619796
    %v1628 = vmul.f32 %v1625, %v1627
    %v1629 = vadd.f32 %v1628, 0.0036580483
    %v1630 = vmul.f32 %v1625, %v1629
    %v1631 = vadd.f32 %v1630, 0.05243302
    %v1632 = vmul.f32 %v1625, %v1631
    %v1633 = vadd.f32 %v1632, 0.18741608
    %v1634 = vmul.f32 %v1625, %v1633
    %v1635 = vadd.f32 %v1634, 1.1283791
    %v1636 = vmul.f32 %v1062, %v1635
    %v1637 = vmul.f32 %v1625, 3.8918573e-05
    %v1638 = vadd.f32 %v1637, 0.001143296
    %v1639 = vmul.f32 %v1625, %v1638
    %v1640 = vadd.f32 %v1639, 0.014752088
    %v1641 = vmul.f32 %v1625, %v1640
    %v1642 = vadd.f32 %v1641, 0.112945676
    %v1643 = vmul.f32 %v1625, %v1642
    %v1644 = vadd.f32 %v1643, 0.4994258
    %v1645 = vmul.f32 %v1625, %v1644
    %v1646 = vadd.f32 %v1645, 1.0
    %v1647 = vrcp.pop %v1646
    %v1648 = vmul.f32 %v1646, %v1647
    %v1649 = vsub.f32 1.0, %v1648
    %v1650 = vmul.f32 %v1647, %v1649
    %v1651 = vadd.f32 %v1647, %v1650
    %vm1652 = vweird.f32 %v1646
    %vm1653 = vweird.f32 %v1647
    %vm1654 = vmor %vm1652, %vm1653
    %v1655 = vsel %vm1654, %v1647, %v1651
    %v1656 = vand.u32 2147483647, %v1646
    %vm1657 = vcmp.eq.f32.partialorder %v1656, 8.507059e+37
    %v1658 = vand.u32 %v1646, 2147483648
    %v1659 = vor.u32 1.1754944e-38, %v1658
    %v1660 = vsel %vm1657, %v1659, %v1655
    %v1661 = vmul.f32 %v1636, %v1660
    %v1662 = vmin.f32 %v1661, 1.0
    %v1663 = vmax.f32 %v1662, -1.0
    %v1664 = vmul.f32 %v1063, %v1063
    %v1665 = vmin.f32 16.0, %v1664
    %v1666 = vmul.f32 %v1665, 2.1237322e-06
    %v1667 = vadd.f32 %v1666, 0.00028619796
    %v1668 = vmul.f32 %v1665, %v1667
    %v1669 = vadd.f32 %v1668, 0.0036580483
    %v1670 = vmul.f32 %v1665, %v1669
    %v1671 = vadd.f32 %v1670, 0.05243302
    %v1672 = vmul.f32 %v1665, %v1671
    %v1673 = vadd.f32 %v1672, 0.18741608
    %v1674 = vmul.f32 %v1665, %v1673
    %v1675 = vadd.f32 %v1674, 1.1283791
    %v1676 = vmul.f32 %v1063, %v1675
    %v1677 = vmul.f32 %v1665, 3.8918573e-05
    %v1678 = vadd.f32 %v1677, 0.001143296
    %v1679 = vmul.f32 %v1665, %v1678
    %v1680 = vadd.f32 %v1679, 0.014752088
    %v1681 = vmul.f32 %v1665, %v1680
    %v1682 = vadd.f32 %v1681, 0.112945676
    %v1683 = vmul.f32 %v1665, %v1682
    %v1684 = vadd.f32 %v1683, 0.4994258
    %v1685 = vmul.f32 %v1665, %v1684
    %v1686 = vadd.f32 %v1685, 1.0
    %v1687 = vrcp.pop %v1686
    %v1688 = vmul.f32 %v1686, %v1687
    %v1689 = vsub.f32 1.0, %v1688
    %v1690 = vmul.f32 %v1687, %v1689
    %v1691 = vadd.f32 %v1687, %v1690
    %vm1692 = vweird.f32 %v1686
    %vm1693 = vweird.f32 %v1687
    %vm1694 = vmor %vm1692, %vm1693
    %v1695 = vsel %vm1694, %v1687, %v1691
    %v1696 = vand.u32 2147483647, %v1686
    %vm1697 = vcmp.eq.f32.partialorder %v1696, 8.507059e+37
    %v1698 = vand.u32 %v1686, 2147483648
    %v1699 = vor.u32 1.1754944e-38, %v1698
    %v1700 = vsel %vm1697, %v1699, %v1695
    %v1701 = vmul.f32 %v1676, %v1700
    %v1702 = vmin.f32 %v1701, 1.0
    %v1703 = vmax.f32 %v1702, -1.0
    %v1704 = vadd.f32 %v1103, 1.0
    %v1705 = vadd.f32 %v1143, 1.0
    %v1706 = vadd.f32 %v1183, 1.0
    %v1707 = vadd.f32 %v1223, 1.0
    %v1708 = vadd.f32 %v1263, 1.0
    %v1709 = vadd.f32 %v1303, 1.0
    %v1710 = vadd.f32 %v1343, 1.0
    %v1711 = vadd.f32 %v1383, 1.0
    %v1712 = vadd.f32 %v1423, 1.0
    %v1713 = vadd.f32 %v1463, 1.0
    %v1714 = vadd.f32 %v1503, 1.0
    %v1715 = vadd.f32 %v1543, 1.0
    %v1716 = vadd.f32 %v1583, 1.0
    %v1717 = vadd.f32 %v1623, 1.0
    %v1718 = vadd.f32 %v1663, 1.0
    %v1719 = vadd.f32 %v1703, 1.0
    %v1720 = vmul.f32 %v1032, %v1704
    %v1721 = vmul.f32 %v1033, %v1705
    %v1722 = vmul.f32 %v1034, %v1706
    %v1723 = vmul.f32 %v1035, %v1707
    %v1724 = vmul.f32 %v1036, %v1708
    %v1725 = vmul.f32 %v1037, %v1709
    %v1726 = vmul.f32 %v1038, %v1710
    %v1727 = vmul.f32 %v1039, %v1711
    %v1728 = vmul.f32 %v1040, %v1712
    %v1729 = vmul.f32 %v1041, %v1713
    %v1730 = vmul.f32 %v1042, %v1714
    %v1731 = vmul.f32 %v1043, %v1715
    %v1732 = vmul.f32 %v1044, %v1716
    %v1733 = vmul.f32 %v1045, %v1717
    %v1734 = vmul.f32 %v1046, %v1718
    %v1735 = vmul.f32 %v1047, %v1719
    %v1736 = vld [vmem:[%s4] sm:$0xff]
    %v1737 = vld [vmem:[%s4 + $0x8] sm:$0xff]
    %v1738 = vld [vmem:[%s4 + $0x10] sm:$0xff]
    %v1739 = vld [vmem:[%s4 + $0x18] sm:$0xff]
    %1741 = vset.pattern.permute.xlu0 0
    %1742 = vperm.xlu0 %1741, %v39
    %v1743 = vpop.permute.xlu0 %1742
    %1746 = vset.pattern.permute.xlu0 0
    %1747 = vperm.xlu0 %1746, %v40
    %v1748 = vpop.permute.xlu0 %1747
    %1751 = vset.pattern.permute.xlu0 0
    %1752 = vperm.xlu0 %1751, %v41
    %v1753 = vpop.permute.xlu0 %1752
    %1756 = vset.pattern.permute.xlu0 0
    %1757 = vperm.xlu0 %1756, %v42
    %v1758 = vpop.permute.xlu0 %1757
    %1760 = vmatpush.msra.mxu0 %v1735
    %1761 = vmatpush.msra.mxu0 %v1734
    %1762 = vmatpush.msra.mxu0 %v1733
    %1763 = vmatpush.msra.mxu0 %v1732
    %1764 = vmatpush.msra.mxu0 %v1731
    %1765 = vmatpush.msra.mxu0 %v1730
    %1766 = vmatpush.msra.mxu0 %v1729
    %1767 = vmatpush.msra.mxu0 %v1728
    %1768 = vmatpush.msra.mxu0 %v1727
    %1769 = vmatpush.msra.mxu0 %v1726
    %1770 = vmatpush.msra.mxu0 %v1725
    %1771 = vmatpush.msra.mxu0 %v1724
    %1772 = vmatpush.msra.mxu0 %v1723
    %1773 = vmatpush.msra.mxu0 %v1722
    %1774 = vmatpush.msra.mxu0 %v1721
    %1775 = vmatpush.msra.mxu0 %v1720
    %1776 = vmatmul.f32.gmra.mxu0 %v1736
    %v1777 = vpop.f32.mrf.mxu0
    %v1778 = vadd.f32 %v1743, %v1777
    %1779 = vmatmul.f32.gmra.mxu0 %v1737
    %v1780 = vpop.f32.mrf.mxu0
    %v1781 = vadd.f32 %v1748, %v1780
    %1782 = vmatmul.f32.gmra.mxu0 %v1738
    %v1783 = vpop.f32.mrf.mxu0
    %v1784 = vadd.f32 %v1753, %v1783
    %1785 = vmatmul.f32.gmra.mxu0 %v1739
    %v1786 = vpop.f32.mrf.mxu0
    %v1787 = vadd.f32 %v1758, %v1786
    %1788 = vdwg.mxu0
    %1789 = vst [vmem:[#allocation2] sm:$0xff] %v1778
    %1790 = vst [vmem:[#allocation2 + $0x8] sm:$0xff] %v1781
    %1791 = vst [vmem:[#allocation2 + $0x10] sm:$0xff] %v1784
    %1792 = vst [vmem:[#allocation2 + $0x18] sm:$0xff] %v1787
    // Predicated region
    $region22: #{tpu_custom_call.1} parent=1 // pred_check
      _
    $region23: #{tpu_custom_call.1} parent=1 // pred_check_branch
      %1794 = sbr.rel (0) target = $region25
    $region24: #{tpu_custom_call.1} parent=1 // pred_region
      %1796 = vsyncadd [#allocation3], 0
      %s1797 = sshll.u32 [#allocation2], 4
      %s1798 = int_to_ptr.vmem [resolvable:$true] %s1797
      %s1799 = sshll.u32 %s5, 4
      %s1800 = int_to_ptr.hbm [resolvable:$true] %s1799
      %1805 = dma.vmem_to_hbm [thread:$0]  %s1798, 512, %s1800, [#allocation3], 128, 128, 8
    $region25: #{tpu_custom_call.1} parent=1 // pred_fallthru
      _
    // Predicated region
    $region26: #{tpu_custom_call.1} parent=1 // pred_check
      _
    $region27: #{tpu_custom_call.1} parent=1 // pred_check_branch
      %1807 = sbr.rel (0) target = $region29
    $region28: #{tpu_custom_call.1} parent=1 // pred_region
      %1809 = dma.done [#allocation3], 512
    $region29: #{tpu_custom_call.1} parent=1 // pred_fallthru
      _
    %1810 = vsyncpa [#allocation3], 1

</llo_original>
